<compile_context>
chip_gen: v7x
topology: tpu7x:2x2x1
jax: 0.10.0
libtpu: 0.0.40
codegen_flags: <defaults>
</compile_context>

<pallas_src>
import functools

import jax
import jax.numpy as jnp
from jax.experimental import pallas as pl
from jax.experimental.pallas import tpu as pltpu


def _round_up(x, m):
    return ((x + m - 1) // m) * m


# ----------------------------------------------------------------------------
# Fused Pallas kernel
# ----------------------------------------------------------------------------
def _temporal_block_kernel(*refs, K, dilation, TL, H, has_downsample):
    """One (batch, L-tile) step of the fused TemporalBlock.

    refs layout (has_downsample=True):
        x_ref   (1, TL, Cin_p)      current input tile (channels padded to 128)
        w1_ref  (K, Cin_p, Cout_p)  conv1 taps        b1_ref (1, Cout_p)
        w2_ref  (K, Cout_p, Cout_p) conv2 taps        b2_ref (1, Cout_p)
        wd_ref  (Cin_p, Cout_p)     1x1 downsample    bd_ref (1, Cout_p)
        o_ref   (1, TL, Cout_p)
        x_buf   VMEM (H+TL, Cin_p)  f32: causal history (rows [0,H)) + tile
        h1_buf  VMEM (H+TL, Cout_p) f32: causal history + conv1 output
    refs layout (has_downsample=False): same but without wd_ref / bd_ref.
    """
    if has_downsample:
        (x_ref, w1_ref, b1_ref, w2_ref, b2_ref, wd_ref, bd_ref,
         o_ref, x_buf, h1_buf) = refs
    else:
        (x_ref, w1_ref, b1_ref, w2_ref, b2_ref,
         o_ref, x_buf, h1_buf) = refs
        wd_ref = bd_ref = None

    t = pl.program_id(1)
    cin_p = x_buf.shape[1]
    cout_p = h1_buf.shape[1]

    # --- causal history management (replaces the HBM-side jnp.pad) ----------
    if H > 0:
        @pl.when(t == 0)
        def _zero_history():          # causal left zero-padding
            x_buf[pl.ds(0, H), :] = jnp.zeros((H, cin_p), jnp.float32)
            h1_buf[pl.ds(0, H), :] = jnp.zeros((H, cout_p), jnp.float32)

        @pl.when(t > 0)
        def _carry_history():         # carry last H rows of the previous tile
            x_buf[pl.ds(0, H), :] = x_buf[pl.ds(TL, H), :]
            h1_buf[pl.ds(0, H), :] = h1_buf[pl.ds(TL, H), :]

    # bring the current input tile into the working buffer (f32)
    x_tile = x_ref[0].astype(jnp.float32)                 # (TL, cin_p)
    x_buf[pl.ds(H, TL), :] = x_tile

    # --- conv1 + bias + relu (register-value accumulation, 1 store) ---------
    acc = jnp.broadcast_to(b1_ref[...], (TL, cout_p))
    for k in range(K):                                    # static unrolled taps
        acc = acc + jnp.dot(x_buf[pl.ds(k * dilation, TL), :], w1_ref[k],
                            preferred_element_type=jnp.float32)
    h1 = jnp.maximum(acc, 0.0)
    h1_buf[pl.ds(H, TL), :] = h1

    # --- conv2 + bias --------------------------------------------------------
    acc = jnp.broadcast_to(b2_ref[...], (TL, cout_p))
    for k in range(K):
        acc = acc + jnp.dot(h1_buf[pl.ds(k * dilation, TL), :], w2_ref[k],
                            preferred_element_type=jnp.float32)
    h2 = jnp.maximum(acc, 0.0)                            # relu2(conv2)

    # --- residual (1x1 downsample / plain identity) + final relu ------------
    if has_downsample:
        res = jnp.dot(x_tile, wd_ref[...],
                      preferred_element_type=jnp.float32) + bd_ref[...]
    else:
        res = x_tile                                      # Cin_p == Cout_p here
    o_ref[0] = jnp.maximum(h2 + res, 0.0).astype(o_ref.dtype)


# ----------------------------------------------------------------------------
# Wrapper: layout, channel padding, tiling, pallas_call
# ----------------------------------------------------------------------------
def temporal_block_forward(x_ncl, params, *, dilation, tile_l=512):
    """Full TemporalBlock forward.  x_ncl is (B, C_in, L) like PyTorch."""
    B, Cin, L = x_ncl.shape
    w1 = params["w1"]                                  # (K, Cin, Cout)
    w2 = params["w2"]                                  # (K, Cout, Cout)
    K = w1.shape[0]
    Cout = w1.shape[2]
    has_downsample = params.get("wd") is not None
    if not has_downsample:
        assert Cin == Cout, "identity residual requires Cin == Cout"

    # lane-dense channel padding (last dim multiple of 128)
    cin_p = _round_up(Cin, 128)
    cout_p = _round_up(Cout, 128)
    H = (K - 1) * dilation                             # causal halo per conv

    # L tile: multiple of 8, at least the halo; raise tile_l (and the scoped
    # VMEM limit) for very wide models; keep it modest on v7x (64 MiB VMEM).
    TL = min(tile_l, L)
    TL = max(_round_up(TL, 8), _round_up(H, 8), 8)
    Lp = _round_up(L, TL)
    NT = Lp // TL

    # channels-last; channel/time padded ONCE at the boundary.  The causal
    # left zero-padding is done in-kernel (zeroed history scratch), so no
    # padded activation copies ever hit HBM.
    x_blc = jnp.transpose(x_ncl, (0, 2, 1))            # (B, L, Cin)
    xp = jnp.pad(x_blc.astype(jnp.float32),
                 ((0, 0), (0, Lp - L), (0, cin_p - Cin)))

    def pad_w(w):                                      # (K, ci, co) padded
        kk, ci, co = w.shape
        return jnp.zeros((kk, _round_up(ci, 128), cout_p),
                         jnp.float32).at[:, :ci, :co].set(w)

    w1p = pad_w(w1)                                    # (K, cin_p, cout_p)
    w2p = pad_w(w2)                                    # (K, cout_p, cout_p)
    b1p = jnp.zeros((1, cout_p), jnp.float32).at[0, :Cout].set(params["b1"])
    b2p = jnp.zeros((1, cout_p), jnp.float32).at[0, :Cout].set(params["b2"])

    kernel = functools.partial(_temporal_block_kernel,
                               K=K, dilation=dilation, TL=TL, H=H,
                               has_downsample=has_downsample)

    in_specs = [
        pl.BlockSpec((1, TL, cin_p), lambda b, t: (b, t, 0)),       # x
        pl.BlockSpec((K, cin_p, cout_p), lambda b, t: (0, 0, 0)),   # w1
        pl.BlockSpec((1, cout_p), lambda b, t: (0, 0)),             # b1
        pl.BlockSpec((K, cout_p, cout_p), lambda b, t: (0, 0, 0)),  # w2
        pl.BlockSpec((1, cout_p), lambda b, t: (0, 0)),             # b2
    ]
    args = [xp, w1p, b1p, w2p, b2p]

    flops = 2 * B * Lp * (K * cin_p * cout_p + K * cout_p * cout_p)
    bytes_accessed = 4 * (B * Lp * (cin_p + cout_p)
                          + K * cin_p * cout_p + K * cout_p * cout_p
                          + 2 * cout_p)
    if has_downsample:
        wdp = jnp.zeros((cin_p, cout_p), jnp.float32).at[:Cin, :Cout].set(
            params["wd"])
        bdp = jnp.zeros((1, cout_p), jnp.float32).at[0, :Cout].set(params["bd"])
        in_specs += [
            pl.BlockSpec((cin_p, cout_p), lambda b, t: (0, 0)),     # wd
            pl.BlockSpec((1, cout_p), lambda b, t: (0, 0)),         # bd
        ]
        args += [wdp, bdp]
        flops += 2 * B * Lp * cin_p * cout_p
        bytes_accessed += 4 * (cin_p * cout_p + cout_p)

    out_p = pl.pallas_call(
        kernel,
        out_shape=jax.ShapeDtypeStruct((B, Lp, cout_p), jnp.float32),
        grid_spec=pltpu.PrefetchScalarGridSpec(
            num_scalar_prefetch=0,
            grid=(B, NT),
            in_specs=in_specs,
            out_specs=pl.BlockSpec((1, TL, cout_p), lambda b, t: (b, t, 0)),
            scratch_shapes=[
                pltpu.VMEM((H + TL, cin_p), jnp.float32),   # x history + tile
                pltpu.VMEM((H + TL, cout_p), jnp.float32),  # h1 history + tile
            ],
        ),
        compiler_params=pltpu.CompilerParams(
            dimension_semantics=("parallel", "arbitrary"),
            vmem_limit_bytes=64 << 20),
        cost_estimate=pl.CostEstimate(flops=flops, transcendentals=0,
                                      bytes_accessed=bytes_accessed),
    )(*args)

    out_blc = out_p[:, :L, :Cout]                      # strip padding
    return jnp.transpose(out_blc, (0, 2, 1)).astype(x_ncl.dtype)


# ----------------------------------------------------------------------------
# Parameter setup (deterministic, weight_norm reparameterization)
# ----------------------------------------------------------------------------
def weight_norm_reparam(v_oik, g_o):
    """PyTorch weight_norm(dim=0): W = g * v / ||v||, norm over (C_in, K)."""
    norm = jnp.sqrt(jnp.sum(v_oik * v_oik, axis=(1, 2), keepdims=True))
    return g_o[:, None, None] * v_oik / norm


def make_params(key, n_inputs, n_outputs, kernel_size):
    k = jax.random.split(key, 6)
    v1 = 0.01 * jax.random.normal(k[0], (n_outputs, n_inputs, kernel_size), jnp.float32)
    g1 = 1.0 + 0.1 * jax.random.normal(k[1], (n_outputs,), jnp.float32)
    v2 = 0.01 * jax.random.normal(k[2], (n_outputs, n_outputs, kernel_size), jnp.float32)
    g2 = 1.0 + 0.1 * jax.random.normal(k[3], (n_outputs,), jnp.float32)
    b1 = 0.01 * jax.random.normal(k[5], (n_outputs,), jnp.float32)
    b2 = jnp.zeros((n_outputs,), jnp.float32)

    W1 = weight_norm_reparam(v1, g1)                   # (Cout, Cin, K)
    W2 = weight_norm_reparam(v2, g2)
    params = {
        "w1": jnp.transpose(W1, (2, 1, 0)),            # (K, Cin, Cout)
        "b1": b1,
        "w2": jnp.transpose(W2, (2, 1, 0)),            # (K, Cout, Cout)
        "b2": b2,
    }
    if n_inputs != n_outputs:
        wd = 0.01 * jax.random.normal(k[4], (n_outputs, n_inputs, 1), jnp.float32)
        params["wd"] = wd[:, :, 0].T                   # (Cin, Cout)
        params["bd"] = jnp.zeros((n_outputs,), jnp.float32)
    else:                                              # PyTorch: identity residual
        params["wd"] = None
        params["bd"] = None
    return params


# ----------------------------------------------------------------------------
# Pure-JAX reference (for correctness check)
# ----------------------------------------------------------------------------
def ref_causal_conv_relu(x_blc, w_kio, bias, dilation):
    K = w_kio.shape[0]
    L = x_blc.shape[1]
    pad = (K - 1) * dilation
    xp = jnp.pad(x_blc, ((0, 0), (pad, 0), (0, 0)))
    out = bias[None, None, :]
    for k in range(K):
        out = out + jnp.einsum("blc,cd->bld",
                               xp[:, k * dilation:k * dilation + L, :], w_kio[k])
    return jnp.maximum(out, 0.0)


def ref_forward(x_ncl, params, dilation):
    x = jnp.transpose(x_ncl, (0, 2, 1))
    h1 = ref_causal_conv_relu(x, params["w1"], params["b1"], dilation)
    h2 = ref_causal_conv_relu(h1, params["w2"], params["b2"], dilation)
    if params["wd"] is None:
        res = x
    else:
        res = jnp.einsum("blc,cd->bld", x, params["wd"]) + params["bd"][None, None, :]
    out = jnp.maximum(h2 + res, 0.0)
    return jnp.transpose(out, (0, 2, 1))


# ----------------------------------------------------------------------------
if __name__ == "__main__":
    key = jax.random.PRNGKey(0)
    configs = [
        # downsample residual, dilation 2, 2 L-tiles (exercises history carry)
        dict(B=2, Cin=4, Cout=8, L=16, K=3, dilation=2, tile_l=8),
        # identity residual (Cin == Cout), single L-tile
        dict(B=2, Cin=8, Cout=8, L=16, K=2, dilation=1, tile_l=256),
        # identity residual, 4 L-tiles, halo == tile (stress history carry path)
        dict(B=2, Cin=8, Cout=8, L=32, K=3, dilation=4, tile_l=8),
    ]
    for i, cfg in enumerate(configs):
        kx, kp, key = jax.random.split(key, 3)
        x = jax.random.normal(kx, (cfg["B"], cfg["Cin"], cfg["L"]), jnp.float32)
        params = make_params(kp, cfg["Cin"], cfg["Cout"], cfg["K"])

        out = temporal_block_forward(x, params, dilation=cfg["dilation"],
                                     tile_l=cfg["tile_l"])
        out = jax.block_until_ready(out)

        ref = ref_forward(x, params, cfg["dilation"])
        assert out.shape == (cfg["B"], cfg["Cout"], cfg["L"]), out.shape
        max_err = float(jnp.max(jnp.abs(out - ref)))
        assert jnp.allclose(out, ref, atol=1e-4, rtol=1e-4), (i, max_err)

    print("KERNEL_OK")
</pallas_src>

<mosaic_0001>
module attributes {stable_mosaic.version = 11 : i64} {
  func.func @_temporal_block_kernel(%arg0: i32, %arg1: i32, %arg2: memref<1x8x128xf32, #tpu.memory_space<vmem>>, %arg3: memref<3x128x128xf32, #tpu.memory_space<vmem>>, %arg4: memref<1x128xf32, #tpu.memory_space<vmem>>, %arg5: memref<3x128x128xf32, #tpu.memory_space<vmem>>, %arg6: memref<1x128xf32, #tpu.memory_space<vmem>>, %arg7: memref<128x128xf32, #tpu.memory_space<vmem>>, %arg8: memref<1x128xf32, #tpu.memory_space<vmem>>, %arg9: memref<1x8x128xf32, #tpu.memory_space<vmem>>, %arg10: memref<12x128xf32, #tpu.memory_space<vmem>>, %arg11: memref<12x128xf32, #tpu.memory_space<vmem>>) attributes {dimension_semantics = [#tpu.dimension_semantics<parallel>, #tpu.dimension_semantics<arbitrary>], iteration_bounds = array<i64: 2, 2>, scalar_prefetch = 0 : i64, scratch_operands = 2 : i64, tpu.core_type = #tpu.core_type<tc>, window_params = [{transform_indices = @transform_0, window_bounds = array<i64: 1, 8, 128>}, {pipeline_mode = #tpu.pipeline_mode<synchronous>, transform_indices = @transform_1, window_bounds = array<i64: 3, 128, 128>}, {pipeline_mode = #tpu.pipeline_mode<synchronous>, transform_indices = @transform_2, window_bounds = array<i64: 1, 128>}, {pipeline_mode = #tpu.pipeline_mode<synchronous>, transform_indices = @transform_3, window_bounds = array<i64: 3, 128, 128>}, {pipeline_mode = #tpu.pipeline_mode<synchronous>, transform_indices = @transform_4, window_bounds = array<i64: 1, 128>}, {pipeline_mode = #tpu.pipeline_mode<synchronous>, transform_indices = @transform_5, window_bounds = array<i64: 128, 128>}, {pipeline_mode = #tpu.pipeline_mode<synchronous>, transform_indices = @transform_6, window_bounds = array<i64: 1, 128>}, {transform_indices = @transform_7, window_bounds = array<i64: 1, 8, 128>}]} {
    %c0_i32 = arith.constant 0 : i32
    %0 = arith.cmpi eq, %arg1, %c0_i32 : i32
    %1 = arith.extui %0 : i1 to i32
    %c0_i32_0 = arith.constant 0 : i32
    %2 = arith.cmpi ne, %1, %c0_i32_0 : i32
    scf.if %2 {
      %cst_56 = arith.constant 0.000000e+00 : f32
      %61 = vector.broadcast %cst_56 : f32 to vector<4x128xf32>
      %c0_57 = arith.constant 0 : index
      %c0_58 = arith.constant 0 : index
      %62 = vector.load %arg10[%c0_57, %c0_58] : memref<12x128xf32, #tpu.memory_space<vmem>>, vector<4x128xf32>
      tpu.vector_store %arg10[%c0_57, %c0_58], %61 {strides = array<i32>} : memref<12x128xf32, #tpu.memory_space<vmem>>, vector<4x128xf32>,
      %cst_59 = arith.constant 0.000000e+00 : f32
      %63 = vector.broadcast %cst_59 : f32 to vector<4x128xf32>
      %c0_60 = arith.constant 0 : index
      %c0_61 = arith.constant 0 : index
      %64 = vector.load %arg11[%c0_60, %c0_61] : memref<12x128xf32, #tpu.memory_space<vmem>>, vector<4x128xf32>
      tpu.vector_store %arg11[%c0_60, %c0_61], %63 {strides = array<i32>} : memref<12x128xf32, #tpu.memory_space<vmem>>, vector<4x128xf32>,
    } else {
    }
    %c0_i32_1 = arith.constant 0 : i32
    %3 = arith.cmpi sgt, %arg1, %c0_i32_1 : i32
    %4 = arith.extui %3 : i1 to i32
    %c0_i32_2 = arith.constant 0 : i32
    %5 = arith.cmpi ne, %4, %c0_i32_2 : i32
    scf.if %5 {
      %c8 = arith.constant 8 : index
      %c0_56 = arith.constant 0 : index
      %61 = vector.load %arg10[%c8, %c0_56] : memref<12x128xf32, #tpu.memory_space<vmem>>, vector<4x128xf32>
      %c0_57 = arith.constant 0 : index
      %c0_58 = arith.constant 0 : index
      %62 = vector.load %arg10[%c0_57, %c0_58] : memref<12x128xf32, #tpu.memory_space<vmem>>, vector<4x128xf32>
      tpu.vector_store %arg10[%c0_57, %c0_58], %61 {strides = array<i32>} : memref<12x128xf32, #tpu.memory_space<vmem>>, vector<4x128xf32>,
      %c8_59 = arith.constant 8 : index
      %c0_60 = arith.constant 0 : index
      %63 = vector.load %arg11[%c8_59, %c0_60] : memref<12x128xf32, #tpu.memory_space<vmem>>, vector<4x128xf32>
      %c0_61 = arith.constant 0 : index
      %c0_62 = arith.constant 0 : index
      %64 = vector.load %arg11[%c0_61, %c0_62] : memref<12x128xf32, #tpu.memory_space<vmem>>, vector<4x128xf32>
      tpu.vector_store %arg11[%c0_61, %c0_62], %63 {strides = array<i32>} : memref<12x128xf32, #tpu.memory_space<vmem>>, vector<4x128xf32>,
    } else {
    }
    %c0 = arith.constant 0 : index
    %c0_3 = arith.constant 0 : index
    %c0_4 = arith.constant 0 : index
    %6 = vector.load %arg2[%c0, %c0_3, %c0_4] : memref<1x8x128xf32, #tpu.memory_space<vmem>>, vector<1x8x128xf32>
    %7 = vector.shape_cast %6 : vector<1x8x128xf32> to vector<8x128xf32>
    %c4 = arith.constant 4 : index
    %c0_5 = arith.constant 0 : index
    %8 = vector.load %arg10[%c4, %c0_5] : memref<12x128xf32, #tpu.memory_space<vmem>>, vector<8x128xf32>
    tpu.vector_store %arg10[%c4, %c0_5], %7 {strides = array<i32>} : memref<12x128xf32, #tpu.memory_space<vmem>>, vector<8x128xf32>,
    %c0_6 = arith.constant 0 : index
    %c0_7 = arith.constant 0 : index
    %9 = vector.load %arg4[%c0_6, %c0_7] : memref<1x128xf32, #tpu.memory_space<vmem>>, vector<1x128xf32>
    %10 = vector.shape_cast %9 : vector<1x128xf32> to vector<1x128xf32>
    %11 = vector.broadcast %10 : vector<1x128xf32> to vector<8x128xf32>
    %c0_8 = arith.constant 0 : index
    %c0_9 = arith.constant 0 : index
    %12 = vector.load %arg10[%c0_8, %c0_9] : memref<12x128xf32, #tpu.memory_space<vmem>>, vector<8x128xf32>
    %c0_10 = arith.constant 0 : index
    %c0_11 = arith.constant 0 : index
    %c0_12 = arith.constant 0 : index
    %13 = vector.load %arg3[%c0_10, %c0_11, %c0_12] : memref<3x128x128xf32, #tpu.memory_space<vmem>>, vector<1x128x128xf32>
    %14 = vector.shape_cast %13 : vector<1x128x128xf32> to vector<128x128xf32>
    %cst = arith.constant dense<0.000000e+00> : vector<8x128xf32>
    %15 = tpu.matmul %12, %14, %cst {dimension_numbers = #tpu.dot_dimension_numbers<[1], [0], [0], [1], [0, 0, 1, 1], [], []>} : vector<8x128xf32>, vector<128x128xf32>, vector<8x128xf32> -> vector<8x128xf32>
    %16 = arith.addf %11, %15 : vector<8x128xf32>
    %c2 = arith.constant 2 : index
    %c0_13 = arith.constant 0 : index
    %17 = vector.load %arg10[%c2, %c0_13] : memref<12x128xf32, #tpu.memory_space<vmem>>, vector<8x128xf32>
    %c1 = arith.constant 1 : index
    %c0_14 = arith.constant 0 : index
    %c0_15 = arith.constant 0 : index
    %18 = vector.load %arg3[%c1, %c0_14, %c0_15] : memref<3x128x128xf32, #tpu.memory_space<vmem>>, vector<1x128x128xf32>
    %19 = vector.shape_cast %18 : vector<1x128x128xf32> to vector<128x128xf32>
    %cst_16 = arith.constant dense<0.000000e+00> : vector<8x128xf32>
    %20 = tpu.matmul %17, %19, %cst_16 {dimension_numbers = #tpu.dot_dimension_numbers<[1], [0], [0], [1], [0, 0, 1, 1], [], []>} : vector<8x128xf32>, vector<128x128xf32>, vector<8x128xf32> -> vector<8x128xf32>
    %21 = arith.addf %16, %20 : vector<8x128xf32>
    %c4_17 = arith.constant 4 : index
    %c0_18 = arith.constant 0 : index
    %22 = vector.load %arg10[%c4_17, %c0_18] : memref<12x128xf32, #tpu.memory_space<vmem>>, vector<8x128xf32>
    %c2_19 = arith.constant 2 : index
    %c0_20 = arith.constant 0 : index
    %c0_21 = arith.constant 0 : index
    %23 = vector.load %arg3[%c2_19, %c0_20, %c0_21] : memref<3x128x128xf32, #tpu.memory_space<vmem>>, vector<1x128x128xf32>
    %24 = vector.shape_cast %23 : vector<1x128x128xf32> to vector<128x128xf32>
    %cst_22 = arith.constant dense<0.000000e+00> : vector<8x128xf32>
    %25 = tpu.matmul %22, %24, %cst_22 {dimension_numbers = #tpu.dot_dimension_numbers<[1], [0], [0], [1], [0, 0, 1, 1], [], []>} : vector<8x128xf32>, vector<128x128xf32>, vector<8x128xf32> -> vector<8x128xf32>
    %26 = arith.addf %21, %25 : vector<8x128xf32>
    %cst_23 = arith.constant 0.000000e+00 : f32
    %27 = vector.broadcast %cst_23 : f32 to vector<8x128xf32>
    %28 = arith.maximumf %26, %27 : vector<8x128xf32>
    %c4_24 = arith.constant 4 : index
    %c0_25 = arith.constant 0 : index
    %29 = vector.load %arg11[%c4_24, %c0_25] : memref<12x128xf32, #tpu.memory_space<vmem>>, vector<8x128xf32>
    tpu.vector_store %arg11[%c4_24, %c0_25], %28 {strides = array<i32>} : memref<12x128xf32, #tpu.memory_space<vmem>>, vector<8x128xf32>,
    %c0_26 = arith.constant 0 : index
    %c0_27 = arith.constant 0 : index
    %30 = vector.load %arg6[%c0_26, %c0_27] : memref<1x128xf32, #tpu.memory_space<vmem>>, vector<1x128xf32>
    %31 = vector.shape_cast %30 : vector<1x128xf32> to vector<1x128xf32>
    %32 = vector.broadcast %31 : vector<1x128xf32> to vector<8x128xf32>
    %c0_28 = arith.constant 0 : index
    %c0_29 = arith.constant 0 : index
    %33 = vector.load %arg11[%c0_28, %c0_29] : memref<12x128xf32, #tpu.memory_space<vmem>>, vector<8x128xf32>
    %c0_30 = arith.constant 0 : index
    %c0_31 = arith.constant 0 : index
    %c0_32 = arith.constant 0 : index
    %34 = vector.load %arg5[%c0_30, %c0_31, %c0_32] : memref<3x128x128xf32, #tpu.memory_space<vmem>>, vector<1x128x128xf32>
    %35 = vector.shape_cast %34 : vector<1x128x128xf32> to vector<128x128xf32>
    %cst_33 = arith.constant dense<0.000000e+00> : vector<8x128xf32>
    %36 = tpu.matmul %33, %35, %cst_33 {dimension_numbers = #tpu.dot_dimension_numbers<[1], [0], [0], [1], [0, 0, 1, 1], [], []>} : vector<8x128xf32>, vector<128x128xf32>, vector<8x128xf32> -> vector<8x128xf32>
    %37 = arith.addf %32, %36 : vector<8x128xf32>
    %c2_34 = arith.constant 2 : index
    %c0_35 = arith.constant 0 : index
    %38 = vector.load %arg11[%c2_34, %c0_35] : memref<12x128xf32, #tpu.memory_space<vmem>>, vector<8x128xf32>
    %c1_36 = arith.constant 1 : index
    %c0_37 = arith.constant 0 : index
    %c0_38 = arith.constant 0 : index
    %39 = vector.load %arg5[%c1_36, %c0_37, %c0_38] : memref<3x128x128xf32, #tpu.memory_space<vmem>>, vector<1x128x128xf32>
    %40 = vector.shape_cast %39 : vector<1x128x128xf32> to vector<128x128xf32>
    %cst_39 = arith.constant dense<0.000000e+00> : vector<8x128xf32>
    %41 = tpu.matmul %38, %40, %cst_39 {dimension_numbers = #tpu.dot_dimension_numbers<[1], [0], [0], [1], [0, 0, 1, 1], [], []>} : vector<8x128xf32>, vector<128x128xf32>, vector<8x128xf32> -> vector<8x128xf32>
    %42 = arith.addf %37, %41 : vector<8x128xf32>
    %c4_40 = arith.constant 4 : index
    %c0_41 = arith.constant 0 : index
    %43 = vector.load %arg11[%c4_40, %c0_41] : memref<12x128xf32, #tpu.memory_space<vmem>>, vector<8x128xf32>
    %c2_42 = arith.constant 2 : index
    %c0_43 = arith.constant 0 : index
    %c0_44 = arith.constant 0 : index
    %44 = vector.load %arg5[%c2_42, %c0_43, %c0_44] : memref<3x128x128xf32, #tpu.memory_space<vmem>>, vector<1x128x128xf32>
    %45 = vector.shape_cast %44 : vector<1x128x128xf32> to vector<128x128xf32>
    %cst_45 = arith.constant dense<0.000000e+00> : vector<8x128xf32>
    %46 = tpu.matmul %43, %45, %cst_45 {dimension_numbers = #tpu.dot_dimension_numbers<[1], [0], [0], [1], [0, 0, 1, 1], [], []>} : vector<8x128xf32>, vector<128x128xf32>, vector<8x128xf32> -> vector<8x128xf32>
    %47 = arith.addf %42, %46 : vector<8x128xf32>
    %cst_46 = arith.constant 0.000000e+00 : f32
    %48 = vector.broadcast %cst_46 : f32 to vector<8x128xf32>
    %49 = arith.maximumf %47, %48 : vector<8x128xf32>
    %c0_47 = arith.constant 0 : index
    %c0_48 = arith.constant 0 : index
    %50 = vector.load %arg7[%c0_47, %c0_48] : memref<128x128xf32, #tpu.memory_space<vmem>>, vector<128x128xf32>
    %cst_49 = arith.constant dense<0.000000e+00> : vector<8x128xf32>
    %51 = tpu.matmul %7, %50, %cst_49 {dimension_numbers = #tpu.dot_dimension_numbers<[1], [0], [0], [1], [0, 0, 1, 1], [], []>} : vector<8x128xf32>, vector<128x128xf32>, vector<8x128xf32> -> vector<8x128xf32>
    %c0_50 = arith.constant 0 : index
    %c0_51 = arith.constant 0 : index
    %52 = vector.load %arg8[%c0_50, %c0_51] : memref<1x128xf32, #tpu.memory_space<vmem>>, vector<1x128xf32>
    %53 = vector.broadcast %52 : vector<1x128xf32> to vector<8x128xf32>
    %54 = arith.addf %51, %53 : vector<8x128xf32>
    %55 = arith.addf %49, %54 : vector<8x128xf32>
    %cst_52 = arith.constant 0.000000e+00 : f32
    %56 = vector.broadcast %cst_52 : f32 to vector<8x128xf32>
    %57 = arith.maximumf %55, %56 : vector<8x128xf32>
    %c0_53 = arith.constant 0 : index
    %c0_54 = arith.constant 0 : index
    %c0_55 = arith.constant 0 : index
    %58 = vector.load %arg9[%c0_53, %c0_54, %c0_55] : memref<1x8x128xf32, #tpu.memory_space<vmem>>, vector<1x8x128xf32>
    %59 = vector.shape_cast %58 : vector<1x8x128xf32> to vector<8x128xf32>
    %60 = vector.shape_cast %57 : vector<8x128xf32> to vector<1x8x128xf32>
    tpu.vector_store %arg9[%c0_53, %c0_54, %c0_55], %60 {strides = array<i32>} : memref<1x8x128xf32, #tpu.memory_space<vmem>>, vector<1x8x128xf32>,
    return
  }
  func.func @transform_0(%arg0: i32, %arg1: i32) -> (i32, i32, i32) {
    %c0_i32 = arith.constant 0 : i32
    %c0_i32_0 = arith.constant 0 : i32
    return %arg0, %arg1, %c0_i32 : i32, i32, i32
  }
  func.func @transform_1(%arg0: i32, %arg1: i32) -> (i32, i32, i32) {
    %c0_i32 = arith.constant 0 : i32
    %c0_i32_0 = arith.constant 0 : i32
    %c0_i32_1 = arith.constant 0 : i32
    %c0_i32_2 = arith.constant 0 : i32
    return %c0_i32, %c0_i32_0, %c0_i32_1 : i32, i32, i32
  }
  func.func @transform_2(%arg0: i32, %arg1: i32) -> (i32, i32) {
    %c0_i32 = arith.constant 0 : i32
    %c0_i32_0 = arith.constant 0 : i32
    %c0_i32_1 = arith.constant 0 : i32
    return %c0_i32, %c0_i32_0 : i32, i32
  }
  func.func @transform_3(%arg0: i32, %arg1: i32) -> (i32, i32, i32) {
    %c0_i32 = arith.constant 0 : i32
    %c0_i32_0 = arith.constant 0 : i32
    %c0_i32_1 = arith.constant 0 : i32
    %c0_i32_2 = arith.constant 0 : i32
    return %c0_i32, %c0_i32_0, %c0_i32_1 : i32, i32, i32
  }
  func.func @transform_4(%arg0: i32, %arg1: i32) -> (i32, i32) {
    %c0_i32 = arith.constant 0 : i32
    %c0_i32_0 = arith.constant 0 : i32
    %c0_i32_1 = arith.constant 0 : i32
    return %c0_i32, %c0_i32_0 : i32, i32
  }
  func.func @transform_5(%arg0: i32, %arg1: i32) -> (i32, i32) {
    %c0_i32 = arith.constant 0 : i32
    %c0_i32_0 = arith.constant 0 : i32
    %c0_i32_1 = arith.constant 0 : i32
    return %c0_i32, %c0_i32_0 : i32, i32
  }
  func.func @transform_6(%arg0: i32, %arg1: i32) -> (i32, i32) {
    %c0_i32 = arith.constant 0 : i32
    %c0_i32_0 = arith.constant 0 : i32
    %c0_i32_1 = arith.constant 0 : i32
    return %c0_i32, %c0_i32_0 : i32, i32
  }
  func.func @transform_7(%arg0: i32, %arg1: i32) -> (i32, i32, i32) {
    %c0_i32 = arith.constant 0 : i32
    %c0_i32_0 = arith.constant 0 : i32
    return %arg0, %arg1, %c0_i32 : i32, i32, i32
  }
}

</mosaic_0001>

<llo_original>
// kernel: tpu_custom_call.1
$region0: #{tpu_custom_call.1}
  #allocation0 [shape = 'u32[]', space=smem, size = 0x4, offset = 0x4, fixed_abs, tag = 'smem constant byte address 0x4 - core index']
  #allocation1 [shape = 'u32[144,128]{1,0:T(1,128)}', space=vmem, size = 0x12000, scoped, tag = 'internal scratch']
  #allocation2 [shape = 'f32[12,128]{1,0:T(8,128)}', space=vmem, size = 0x2000, scoped, tag = 'scratch operand']
  #allocation3 [shape = 'f32[12,128]{1,0:T(8,128)}', space=vmem, size = 0x2000, scoped, tag = 'scratch operand']
  %s0 = inlined_call_operand.hbm [shape: f32[2,16,128], index: 0, kind: input, shape index: {}]
  %s1 = inlined_call_operand.hbm [shape: f32[3,128,128], index: 1, kind: input, shape index: {}]
  %s2 = inlined_call_operand.hbm [shape: f32[1,128], index: 2, kind: input, shape index: {}]
  %s3 = inlined_call_operand.hbm [shape: f32[3,128,128], index: 3, kind: input, shape index: {}]
  %s4 = inlined_call_operand.hbm [shape: f32[1,128], index: 4, kind: input, shape index: {}]
  %s5 = inlined_call_operand.hbm [shape: f32[128,128], index: 5, kind: input, shape index: {}]
  %s6 = inlined_call_operand.hbm [shape: f32[1,128], index: 6, kind: input, shape index: {}]
  %s7 = inlined_call_operand.hbm [shape: f32[2,16,128], index: 7, kind: output, shape index: {}]
  %s8 = sld [smem:[#allocation0]]
  $region97: #{tpu_custom_call.1} parent=0
    _
  %s10 = ssub.s32 1, %s8
  %s11 = scalar_select 0, %s10, %s8
  $region1: #{tpu_custom_call.1} parent=0
    #allocation4 [shape = 'u8[8192]{0}', space=vmem, size = 0x2000, scoped, tag = 'input window, operand 0']
    #allocation5 [shape = 's32[2]{0}', space=sflag, size = 0x8, scoped, tag = 'scoped memory for tpu_custom_call.1']
    #allocation6 [shape = 's32[2]{0}', space=sflag, size = 0x8, scoped, tag = 'scoped memory for tpu_custom_call.1']
    #allocation7 [shape = 'u8[196608]{0}', space=vmem, size = 0x30000, scoped, tag = 'input window, operand 1, single buffered']
    #allocation8 [shape = 's32[1]{0}', space=sflag, size = 0x4, scoped, tag = 'scoped memory for tpu_custom_call.1']
    #allocation9 [shape = 'u8[512]{0}', space=vmem, size = 0x400, scoped, tag = 'input window, operand 2, single buffered']
    #allocation10 [shape = 'u8[196608]{0}', space=vmem, size = 0x30000, scoped, tag = 'input window, operand 3, single buffered']
    #allocation11 [shape = 's32[1]{0}', space=sflag, size = 0x4, scoped, tag = 'scoped memory for tpu_custom_call.1']
    #allocation12 [shape = 'u8[512]{0}', space=vmem, size = 0x400, scoped, tag = 'input window, operand 4, single buffered']
    #allocation13 [shape = 'u8[65536]{0}', space=vmem, size = 0x10000, scoped, tag = 'input window, operand 5, single buffered']
    #allocation14 [shape = 's32[1]{0}', space=sflag, size = 0x4, scoped, tag = 'scoped memory for tpu_custom_call.1']
    #allocation15 [shape = 'u8[512]{0}', space=vmem, size = 0x400, scoped, tag = 'input window, operand 6, single buffered']
    #allocation16 [shape = 'u8[8192]{0}', space=vmem, size = 0x2000, scoped, tag = 'output window, operand 0']
    %12 = vsyncpa [#allocation5], 0
    %s13 = scalar_lea.sflag [#allocation5], 1
    %14 = vsyncpa %s13, 0
    %15 = vsyncpa [#allocation8], 0
    %16 = vsyncpa [#allocation11], 0
    %17 = vsyncpa [#allocation14], 0
    %18 = vsyncpa [#allocation6], 0
    %s19 = scalar_lea.sflag [#allocation6], 1
    %20 = vsyncpa %s19, 0
    loop: start=0, step=1, limit=6
    $region2: #{tpu_custom_call.1} parent=1 // loop_pre_header
      _
    $region3: #{tpu_custom_call.1} parent=1 // loop_header
      %s22 = sphi 0, %s26
      %p23 = scmp.ge.s32.totalorder %s22, 6
      %s29 = sphi 0, %s41
      %s30 = sphi 0, %s37
      %s31 = sphi 0, %s29
      %s32 = sphi 0, %s30
      %s33 = sphi 0, %s31
      %s34 = sphi 0, %s32
      %s46 = sphi 0, %s48
      %s49 = sphi 0, %s46
      %s50 = sphi 0, %s49
      %s66 = sphi 0, %s50
      %s70 = sphi 0, %s70
      %s72 = sphi 0, %s70
      %s73 = sphi 0, %s72
      %s87 = sphi 0, %s73
      %s91 = sphi 0, %s91
      %s93 = sphi 0, %s91
      %s94 = sphi 0, %s93
      %s108 = sphi 0, %s94
      %s112 = sphi 0, %s112
      %s114 = sphi 0, %s112
      %s115 = sphi 0, %s114
      %s129 = sphi 0, %s115
      %s133 = sphi 0, %s133
      %s135 = sphi 0, %s133
      %s136 = sphi 0, %s135
      %s150 = sphi 0, %s136
      %s154 = sphi 0, %s154
      %s156 = sphi 0, %s154
      %s157 = sphi 0, %s156
      %s171 = sphi 0, %s157
      %s175 = sphi 0, %s175
      %s177 = sphi 0, %s175
      %s178 = sphi 0, %s177
      %s192 = sphi 0, %s178
      %s200 = sphi 0, %s202
      %s203 = sphi 0, %s200
      %s204 = sphi 0, %s203
      %s220 = sphi 0, %s204
    $region4: #{tpu_custom_call.1} parent=1 // loop_header_branch
      %25 = sbr.rel (%p23) target = $region8
    $region5: #{tpu_custom_call.1} parent=1 // loop_body
      %s27 = ssub.s32 %s22, 1
      %s28 = ssub.s32 %s22, 2
      %s35 = sadd.s32 1, %s30
      %p36 = scmp.ge.s32.totalorder %s35, 2
      %s37 = scalar_select %p36, 0, %s35
      %s38 = sadd.s32 1, %s29
      %s39 = scalar_select %p36, %s38, %s29
      %p40 = scmp.ge.s32.totalorder %s39, 2
      %s41 = scalar_select %p40, 0, %s39
      %s42 = ssub.s32 %s29, %s41
      %s43 = ssub.s32 %s30, %s37
      %s44 = sor.u32 %s42, %s43
      %p45 = scmp.eq.s32.totalorder %s44, 0
      %s47 = sadd.s32 %s46, 1
      %s48 = scalar_select %p45, %s46, %s47
      %p51 = pneg %p45
      %p52 = scmp.eq.s32.totalorder %s22, 3
      %p53 = por %p51, %p52
      %p54 = scmp.ne.s32.totalorder %s46, %s49
      %p55 = scmp.eq.s32.totalorder %s22, 0
      %p56 = por %p54, %p55
      %p57 = scmp.ne.s32.totalorder %s46, %s49
      %p58 = scmp.eq.s32.totalorder %s27, 3
      %p59 = por %p57, %p58
      %p60 = scmp.ne.s32.totalorder %s49, %s50
      %p61 = scmp.eq.s32.totalorder %s27, 0
      %p62 = por %p60, %p61
      %p63 = scmp.ne.s32.totalorder %s49, %s50
      %p64 = scmp.eq.s32.totalorder %s28, 3
      %p65 = por %p63, %p64
      %p67 = scmp.ne.s32.totalorder %s50, %s66
      %p68 = scmp.eq.s32.totalorder %s28, 0
      %p69 = por %p67, %p68
      %s71 = sadd.s32 %s70, 1
      %p74 = scmp.eq.s32.totalorder %s22, 3
      %p75 = scmp.ne.s32.totalorder %s70, %s72
      %p76 = scmp.eq.s32.totalorder %s22, 0
      %p77 = por %p75, %p76
      %p78 = scmp.ne.s32.totalorder %s70, %s72
      %p79 = scmp.eq.s32.totalorder %s27, 3
      %p80 = por %p78, %p79
      %p81 = scmp.ne.s32.totalorder %s72, %s73
      %p82 = scmp.eq.s32.totalorder %s27, 0
      %p83 = por %p81, %p82
      %p84 = scmp.ne.s32.totalorder %s72, %s73
      %p85 = scmp.eq.s32.totalorder %s28, 3
      %p86 = por %p84, %p85
      %p88 = scmp.ne.s32.totalorder %s73, %s87
      %p89 = scmp.eq.s32.totalorder %s28, 0
      %p90 = por %p88, %p89
      %s92 = sadd.s32 %s91, 1
      %p95 = scmp.eq.s32.totalorder %s22, 3
      %p96 = scmp.ne.s32.totalorder %s91, %s93
      %p97 = scmp.eq.s32.totalorder %s22, 0
      %p98 = por %p96, %p97
      %p99 = scmp.ne.s32.totalorder %s91, %s93
      %p100 = scmp.eq.s32.totalorder %s27, 3
      %p101 = por %p99, %p100
      %p102 = scmp.ne.s32.totalorder %s93, %s94
      %p103 = scmp.eq.s32.totalorder %s27, 0
      %p104 = por %p102, %p103
      %p105 = scmp.ne.s32.totalorder %s93, %s94
      %p106 = scmp.eq.s32.totalorder %s28, 3
      %p107 = por %p105, %p106
      %p109 = scmp.ne.s32.totalorder %s94, %s108
      %p110 = scmp.eq.s32.totalorder %s28, 0
      %p111 = por %p109, %p110
      %s113 = sadd.s32 %s112, 1
      %p116 = scmp.eq.s32.totalorder %s22, 3
      %p117 = scmp.ne.s32.totalorder %s112, %s114
      %p118 = scmp.eq.s32.totalorder %s22, 0
      %p119 = por %p117, %p118
      %p120 = scmp.ne.s32.totalorder %s112, %s114
      %p121 = scmp.eq.s32.totalorder %s27, 3
      %p122 = por %p120, %p121
      %p123 = scmp.ne.s32.totalorder %s114, %s115
      %p124 = scmp.eq.s32.totalorder %s27, 0
      %p125 = por %p123, %p124
      %p126 = scmp.ne.s32.totalorder %s114, %s115
      %p127 = scmp.eq.s32.totalorder %s28, 3
      %p128 = por %p126, %p127
      %p130 = scmp.ne.s32.totalorder %s115, %s129
      %p131 = scmp.eq.s32.totalorder %s28, 0
      %p132 = por %p130, %p131
      %s134 = sadd.s32 %s133, 1
      %p137 = scmp.eq.s32.totalorder %s22, 3
      %p138 = scmp.ne.s32.totalorder %s133, %s135
      %p139 = scmp.eq.s32.totalorder %s22, 0
      %p140 = por %p138, %p139
      %p141 = scmp.ne.s32.totalorder %s133, %s135
      %p142 = scmp.eq.s32.totalorder %s27, 3
      %p143 = por %p141, %p142
      %p144 = scmp.ne.s32.totalorder %s135, %s136
      %p145 = scmp.eq.s32.totalorder %s27, 0
      %p146 = por %p144, %p145
      %p147 = scmp.ne.s32.totalorder %s135, %s136
      %p148 = scmp.eq.s32.totalorder %s28, 3
      %p149 = por %p147, %p148
      %p151 = scmp.ne.s32.totalorder %s136, %s150
      %p152 = scmp.eq.s32.totalorder %s28, 0
      %p153 = por %p151, %p152
      %s155 = sadd.s32 %s154, 1
      %p158 = scmp.eq.s32.totalorder %s22, 3
      %p159 = scmp.ne.s32.totalorder %s154, %s156
      %p160 = scmp.eq.s32.totalorder %s22, 0
      %p161 = por %p159, %p160
      %p162 = scmp.ne.s32.totalorder %s154, %s156
      %p163 = scmp.eq.s32.totalorder %s27, 3
      %p164 = por %p162, %p163
      %p165 = scmp.ne.s32.totalorder %s156, %s157
      %p166 = scmp.eq.s32.totalorder %s27, 0
      %p167 = por %p165, %p166
      %p168 = scmp.ne.s32.totalorder %s156, %s157
      %p169 = scmp.eq.s32.totalorder %s28, 3
      %p170 = por %p168, %p169
      %p172 = scmp.ne.s32.totalorder %s157, %s171
      %p173 = scmp.eq.s32.totalorder %s28, 0
      %p174 = por %p172, %p173
      %s176 = sadd.s32 %s175, 1
      %p179 = scmp.eq.s32.totalorder %s22, 3
      %p180 = scmp.ne.s32.totalorder %s175, %s177
      %p181 = scmp.eq.s32.totalorder %s22, 0
      %p182 = por %p180, %p181
      %p183 = scmp.ne.s32.totalorder %s175, %s177
      %p184 = scmp.eq.s32.totalorder %s27, 3
      %p185 = por %p183, %p184
      %p186 = scmp.ne.s32.totalorder %s177, %s178
      %p187 = scmp.eq.s32.totalorder %s27, 0
      %p188 = por %p186, %p187
      %p189 = scmp.ne.s32.totalorder %s177, %s178
      %p190 = scmp.eq.s32.totalorder %s28, 3
      %p191 = por %p189, %p190
      %p193 = scmp.ne.s32.totalorder %s178, %s192
      %p194 = scmp.eq.s32.totalorder %s28, 0
      %p195 = por %p193, %p194
      %s196 = ssub.s32 %s29, %s41
      %s197 = ssub.s32 %s30, %s37
      %s198 = sor.u32 %s196, %s197
      %p199 = scmp.eq.s32.totalorder %s198, 0
      %s201 = sadd.s32 %s200, 1
      %s202 = scalar_select %p199, %s200, %s201
      %p205 = pneg %p199
      %p206 = scmp.eq.s32.totalorder %s22, 3
      %p207 = por %p205, %p206
      %p208 = scmp.ne.s32.totalorder %s200, %s203
      %p209 = scmp.eq.s32.totalorder %s22, 0
      %p210 = por %p208, %p209
      %p211 = scmp.ne.s32.totalorder %s200, %s203
      %p212 = scmp.eq.s32.totalorder %s27, 3
      %p213 = por %p211, %p212
      %p214 = scmp.ne.s32.totalorder %s203, %s204
      %p215 = scmp.eq.s32.totalorder %s27, 0
      %p216 = por %p214, %p215
      %p217 = scmp.ne.s32.totalorder %s203, %s204
      %p218 = scmp.eq.s32.totalorder %s28, 3
      %p219 = por %p217, %p218
      %p221 = scmp.ne.s32.totalorder %s204, %s220
      %p222 = scmp.eq.s32.totalorder %s28, 0
      %p223 = por %p221, %p222
      %p224 = scmp.le.s32.totalorder 1, %s22
      %p225 = scmp.lt.s32.totalorder %s22, 5
      %p226 = pnand %p224, %p225
      %p227 = pneg %p226
      // Predicated region
      $region9: #{tpu_custom_call.1} parent=5 // pred_check
        _
      $region10: #{tpu_custom_call.1} parent=5 // pred_check_branch
        %229 = sbr.rel (%p226) target = $region12
      $region11: #{tpu_custom_call.1} parent=5 // pred_region
        %s230 = ssub.s32 %s22, 1
        // Predicated region
        $region13: #{tpu_custom_call.1} parent=11 // pred_check
          %p231 = pneg %p83
        $region14: #{tpu_custom_call.1} parent=11 // pred_check_branch
          %233 = sbr.rel (%p231) target = $region16
        $region15: #{tpu_custom_call.1} parent=11 // pred_region
          %s235 = ssub.s32 6144, 6144
          %236 = vsyncadd [#allocation8], %s235
          %s237 = sshll.u32 [#allocation7], 4
          %s238 = int_to_ptr.vmem [resolvable:$true] %s237
          %243 = dma.hbm_to_vmem [thread:$0]  %s1, 6144, %s238, [#allocation8], 128, 128, 8
        $region16: #{tpu_custom_call.1} parent=11 // pred_fallthru
          _
        // Predicated region
        $region17: #{tpu_custom_call.1} parent=11 // pred_check
          %p244 = pneg %p104
        $region18: #{tpu_custom_call.1} parent=11 // pred_check_branch
          %246 = sbr.rel (%p244) target = $region20
        $region19: #{tpu_custom_call.1} parent=11 // pred_region
          %s248 = ssub.s32 16, 16
          %249 = vsyncadd [#allocation8], %s248
          %s251 = sshll.u32 [#allocation9], 4
          %s252 = int_to_ptr.vmem [resolvable:$true] %s251
          %254 = dma.hbm_to_vmem [thread:$0]  %s2, 16, %s252, [#allocation8]
        $region20: #{tpu_custom_call.1} parent=11 // pred_fallthru
          _
        // Predicated region
        $region21: #{tpu_custom_call.1} parent=11 // pred_check
          %p255 = pneg %p125
        $region22: #{tpu_custom_call.1} parent=11 // pred_check_branch
          %257 = sbr.rel (%p255) target = $region24
        $region23: #{tpu_custom_call.1} parent=11 // pred_region
          %s259 = ssub.s32 6144, 6144
          %260 = vsyncadd [#allocation11], %s259
          %s261 = sshll.u32 [#allocation10], 4
          %s262 = int_to_ptr.vmem [resolvable:$true] %s261
          %267 = dma.hbm_to_vmem [thread:$0]  %s3, 6144, %s262, [#allocation11], 128, 128, 8
        $region24: #{tpu_custom_call.1} parent=11 // pred_fallthru
          _
        // Predicated region
        $region25: #{tpu_custom_call.1} parent=11 // pred_check
          %p268 = pneg %p146
        $region26: #{tpu_custom_call.1} parent=11 // pred_check_branch
          %270 = sbr.rel (%p268) target = $region28
        $region27: #{tpu_custom_call.1} parent=11 // pred_region
          %s272 = ssub.s32 16, 16
          %273 = vsyncadd [#allocation11], %s272
          %s275 = sshll.u32 [#allocation12], 4
          %s276 = int_to_ptr.vmem [resolvable:$true] %s275
          %278 = dma.hbm_to_vmem [thread:$0]  %s4, 16, %s276, [#allocation11]
        $region28: #{tpu_custom_call.1} parent=11 // pred_fallthru
          _
        // Predicated region
        $region29: #{tpu_custom_call.1} parent=11 // pred_check
          %p279 = pneg %p167
        $region30: #{tpu_custom_call.1} parent=11 // pred_check_branch
          %281 = sbr.rel (%p279) target = $region32
        $region31: #{tpu_custom_call.1} parent=11 // pred_region
          %s283 = ssub.s32 2048, 2048
          %284 = vsyncadd [#allocation14], %s283
          %s285 = sshll.u32 [#allocation13], 4
          %s286 = int_to_ptr.vmem [resolvable:$true] %s285
          %291 = dma.hbm_to_vmem [thread:$0]  %s5, 2048, %s286, [#allocation14], 128, 128, 8
        $region32: #{tpu_custom_call.1} parent=11 // pred_fallthru
          _
        // Predicated region
        $region33: #{tpu_custom_call.1} parent=11 // pred_check
          %p292 = pneg %p188
        $region34: #{tpu_custom_call.1} parent=11 // pred_check_branch
          %294 = sbr.rel (%p292) target = $region36
        $region35: #{tpu_custom_call.1} parent=11 // pred_region
          %s296 = ssub.s32 16, 16
          %297 = vsyncadd [#allocation14], %s296
          %s299 = sshll.u32 [#allocation15], 4
          %s300 = int_to_ptr.vmem [resolvable:$true] %s299
          %302 = dma.hbm_to_vmem [thread:$0]  %s6, 16, %s300, [#allocation14]
        $region36: #{tpu_custom_call.1} parent=11 // pred_fallthru
          _
      $region12: #{tpu_custom_call.1} parent=5 // pred_fallthru
        _
      %p303 = scmp.lt.s32.totalorder %s22, 4
      // Predicated region
      $region37: #{tpu_custom_call.1} parent=5 // pred_check
        %p304 = pneg %p303
      $region38: #{tpu_custom_call.1} parent=5 // pred_check_branch
        %306 = sbr.rel (%p304) target = $region40
      $region39: #{tpu_custom_call.1} parent=5 // pred_region
        // Predicated region
        $region41: #{tpu_custom_call.1} parent=39 // pred_check
          %p307 = pneg %p56
        $region42: #{tpu_custom_call.1} parent=39 // pred_check_branch
          %309 = sbr.rel (%p307) target = $region44
        $region43: #{tpu_custom_call.1} parent=39 // pred_region
          %s310 = sand.u32 %s46, 1
          %s311 = scalar_lea.sflag [#allocation5], %s310
          %s312 = sand.u32 %s46, 1
          %s313 = smul.addr %s312, 8
          %s314 = scalar_lea.vmem [#allocation4], %s313
          %s316 = ssub.s32 128, 128
          %317 = vsyncadd %s311, %s316
          %s318 = smul.addr %s29, 2
          %s319 = sadd.s32 %s30, %s318
          %s320 = smul.addr %s319, 128
          %s321 = scalar_lea.hbm %s0, %s320
          %s323 = sshll.u32 %s314, 4
          %s324 = int_to_ptr.vmem [resolvable:$true] %s323
          %326 = dma.hbm_to_vmem [thread:$0]  %s321, 128, %s324, %s311
        $region44: #{tpu_custom_call.1} parent=39 // pred_fallthru
          _
      $region40: #{tpu_custom_call.1} parent=5 // pred_fallthru
        _
      %p327 = scmp.le.s32.totalorder 1, %s22
      %p328 = scmp.lt.s32.totalorder %s22, 5
      %p329 = pnand %p327, %p328
      %p330 = pneg %p329
      // Predicated region
      $region45: #{tpu_custom_call.1} parent=5 // pred_check
        _
      $region46: #{tpu_custom_call.1} parent=5 // pred_check_branch
        %332 = sbr.rel (%p329) target = $region48
      $region47: #{tpu_custom_call.1} parent=5 // pred_region
        %s333 = ssub.s32 %s22, 1
        %s334 = sand.u32 %s49, 1
        %s335 = scalar_lea.sflag [#allocation5], %s334
        %s336 = sand.u32 %s49, 1
        %s337 = smul.addr %s336, 8
        %s338 = scalar_lea.vmem [#allocation4], %s337
        // Predicated region
        $region49: #{tpu_custom_call.1} parent=47 // pred_check
          %p339 = pneg %p62
        $region50: #{tpu_custom_call.1} parent=47 // pred_check_branch
          %341 = sbr.rel (%p339) target = $region52
        $region51: #{tpu_custom_call.1} parent=47 // pred_region
          %342 = dma.done %s335, 128
        $region52: #{tpu_custom_call.1} parent=47 // pred_fallthru
          _
        // Predicated region
        $region53: #{tpu_custom_call.1} parent=47 // pred_check
          %p343 = pneg %p83
        $region54: #{tpu_custom_call.1} parent=47 // pred_check_branch
          %345 = sbr.rel (%p343) target = $region56
        $region55: #{tpu_custom_call.1} parent=47 // pred_region
          %346 = dma.done [#allocation8], 6144
        $region56: #{tpu_custom_call.1} parent=47 // pred_fallthru
          _
        // Predicated region
        $region57: #{tpu_custom_call.1} parent=47 // pred_check
          %p347 = pneg %p104
        $region58: #{tpu_custom_call.1} parent=47 // pred_check_branch
          %349 = sbr.rel (%p347) target = $region60
        $region59: #{tpu_custom_call.1} parent=47 // pred_region
          %350 = dma.done [#allocation8], 16
        $region60: #{tpu_custom_call.1} parent=47 // pred_fallthru
          _
        // Predicated region
        $region61: #{tpu_custom_call.1} parent=47 // pred_check
          %p351 = pneg %p125
        $region62: #{tpu_custom_call.1} parent=47 // pred_check_branch
          %353 = sbr.rel (%p351) target = $region64
        $region63: #{tpu_custom_call.1} parent=47 // pred_region
          %354 = dma.done [#allocation11], 6144
        $region64: #{tpu_custom_call.1} parent=47 // pred_fallthru
          _
        // Predicated region
        $region65: #{tpu_custom_call.1} parent=47 // pred_check
          %p355 = pneg %p146
        $region66: #{tpu_custom_call.1} parent=47 // pred_check_branch
          %357 = sbr.rel (%p355) target = $region68
        $region67: #{tpu_custom_call.1} parent=47 // pred_region
          %358 = dma.done [#allocation11], 16
        $region68: #{tpu_custom_call.1} parent=47 // pred_fallthru
          _
        // Predicated region
        $region69: #{tpu_custom_call.1} parent=47 // pred_check
          %p359 = pneg %p167
        $region70: #{tpu_custom_call.1} parent=47 // pred_check_branch
          %361 = sbr.rel (%p359) target = $region72
        $region71: #{tpu_custom_call.1} parent=47 // pred_region
          %362 = dma.done [#allocation14], 2048
        $region72: #{tpu_custom_call.1} parent=47 // pred_fallthru
          _
        // Predicated region
        $region73: #{tpu_custom_call.1} parent=47 // pred_check
          %p363 = pneg %p188
        $region74: #{tpu_custom_call.1} parent=47 // pred_check_branch
          %365 = sbr.rel (%p363) target = $region76
        $region75: #{tpu_custom_call.1} parent=47 // pred_region
          %366 = dma.done [#allocation14], 16
        $region76: #{tpu_custom_call.1} parent=47 // pred_fallthru
          _
        %s367 = sand.u32 %s49, 1
        %s368 = scalar_lea.sflag [#allocation5], %s367
        %s369 = sand.u32 %s49, 1
        %s370 = smul.addr %s369, 8
        %s371 = scalar_lea.vmem [#allocation4], %s370
        %p372 = pneg %p62
        %p373 = pneg %p59
        %p374 = pneg %p83
        %p375 = pneg %p80
        %p376 = pneg %p104
        %p377 = pneg %p101
        %p378 = pneg %p125
        %p379 = pneg %p122
        %p380 = pneg %p146
        %p381 = pneg %p143
        %p382 = pneg %p167
        %p383 = pneg %p164
        %p384 = pneg %p188
        %p385 = pneg %p185
        %p386 = pneg %p216
        %p387 = pneg %p213
        %s388 = sand.u32 %s203, 1
        %s389 = scalar_lea.sflag [#allocation6], %s388
        %s390 = sand.u32 %s203, 1
        %s391 = smul.addr %s390, 8
        %s392 = scalar_lea.vmem [#allocation16], %s391
        %p393 = scmp.eq.s32.totalorder %s32, 0
        // Predicated region
        $region77: #{tpu_custom_call.1} parent=47 // pred_check
          %p394 = pneg %p393
        $region78: #{tpu_custom_call.1} parent=47 // pred_check_branch
          %396 = sbr.rel (%p394) target = $region80
        $region79: #{tpu_custom_call.1} parent=47 // pred_region
          %397 = vst [vmem:[#allocation2] sm:$0xf] 0.0
          %398 = vst [vmem:[#allocation3] sm:$0xf] 0.0
        $region80: #{tpu_custom_call.1} parent=47 // pred_fallthru
          _
        %p399 = scmp.gt.s32.totalorder %s32, 0
        // Predicated region
        $region81: #{tpu_custom_call.1} parent=47 // pred_check
          %p400 = pneg %p399
        $region82: #{tpu_custom_call.1} parent=47 // pred_check_branch
          %402 = sbr.rel (%p400) target = $region84
        $region83: #{tpu_custom_call.1} parent=47 // pred_region
          %v403 = vld [vmem:[#allocation2 + $0x8] sm:$0xf]
          %404 = vst [vmem:[#allocation2] sm:$0xf] %v403
          %v405 = vld [vmem:[#allocation3 + $0x8] sm:$0xf]
          %406 = vst [vmem:[#allocation3] sm:$0xf] %v405
        $region84: #{tpu_custom_call.1} parent=47 // pred_fallthru
          _
        %v407 = vld [vmem:[%s338] sm:$0xff]
        %408 = vst [vmem:[#allocation2 + $0x4] sm:$0xff] %v407
        %v409 = vld [vmem:[#allocation9] sm:$0x1]
        %v411 = vlaneseq
        %v412 = vshrl.u32 %v411, 7
        %v413 = vsub.s32 0, %v412
        %v414 = vrot.slane %v409, %v413
        %v416 = vld [vmem:[#allocation2] sm:$0xff]
        %v417 = vld [vmem:[#allocation7] sm:$0xff]
        %v418 = vld [vmem:[#allocation7 + $0x8] sm:$0xff]
        %v419 = vld [vmem:[#allocation7 + $0x10] sm:$0xff]
        %v420 = vld [vmem:[#allocation7 + $0x18] sm:$0xff]
        %v421 = vld [vmem:[#allocation7 + $0x20] sm:$0xff]
        %v422 = vld [vmem:[#allocation7 + $0x28] sm:$0xff]
        %v423 = vld [vmem:[#allocation7 + $0x30] sm:$0xff]
        %v424 = vld [vmem:[#allocation7 + $0x38] sm:$0xff]
        %v425 = vld [vmem:[#allocation7 + $0x40] sm:$0xff]
        %v426 = vld [vmem:[#allocation7 + $0x48] sm:$0xff]
        %v427 = vld [vmem:[#allocation7 + $0x50] sm:$0xff]
        %v428 = vld [vmem:[#allocation7 + $0x58] sm:$0xff]
        %v429 = vld [vmem:[#allocation7 + $0x60] sm:$0xff]
        %v430 = vld [vmem:[#allocation7 + $0x68] sm:$0xff]
        %v431 = vld [vmem:[#allocation7 + $0x70] sm:$0xff]
        %v432 = vld [vmem:[#allocation7 + $0x78] sm:$0xff]
        %433 = vmatprep.subr.mxu0 0.0
        %434 = vmatpush1.msra.mxu0 %v417
        %435 = vmatprep.subr.mxu0 0.0
        %436 = vmatpush1.msra.mxu0 %v418
        %437 = vmatprep.subr.mxu0 0.0
        %438 = vmatpush1.msra.mxu0 %v419
        %439 = vmatprep.subr.mxu0 0.0
        %440 = vmatpush1.msra.mxu0 %v420
        %441 = vmatprep.subr.mxu0 0.0
        %442 = vmatpush1.msra.mxu0 %v421
        %443 = vmatprep.subr.mxu0 0.0
        %444 = vmatpush1.msra.mxu0 %v422
        %445 = vmatprep.subr.mxu0 0.0
        %446 = vmatpush1.msra.mxu0 %v423
        %447 = vmatprep.subr.mxu0 0.0
        %448 = vmatpush1.msra.mxu0 %v424
        %449 = vmatprep.subr.mxu0 0.0
        %450 = vmatpush1.msra.mxu0 %v425
        %451 = vmatprep.subr.mxu0 0.0
        %452 = vmatpush1.msra.mxu0 %v426
        %453 = vmatprep.subr.mxu0 0.0
        %454 = vmatpush1.msra.mxu0 %v427
        %455 = vmatprep.subr.mxu0 0.0
        %456 = vmatpush1.msra.mxu0 %v428
        %457 = vmatprep.subr.mxu0 0.0
        %458 = vmatpush1.msra.mxu0 %v429
        %459 = vmatprep.subr.mxu0 0.0
        %460 = vmatpush1.msra.mxu0 %v430
        %461 = vmatprep.subr.mxu0 0.0
        %462 = vmatpush1.msra.mxu0 %v431
        %463 = vmatprep.subr.mxu0 0.0
        %464 = vmatpush1.msra.mxu0 %v432
        %465 = vmatprep.subr.mxu0 0.0
        %466 = vmatpush1.msra.mxu0 0.0
        %467 = vmatprep.subr.mxu0 0.0
        %468 = vmatpush1.msra.mxu0 0.0
        %469 = vmatprep.subr.mxu0 0.0
        %470 = vmatpush1.msra.mxu0 0.0
        %471 = vmatprep.subr.mxu0 0.0
        %472 = vmatpush1.msra.mxu0 0.0
        %473 = vmatprep.subr.mxu0 0.0
        %474 = vmatpush1.msra.mxu0 0.0
        %475 = vmatprep.subr.mxu0 0.0
        %476 = vmatpush1.msra.mxu0 0.0
        %477 = vmatprep.subr.mxu0 0.0
        %478 = vmatpush1.msra.mxu0 0.0
        %479 = vmatprep.subr.mxu0 0.0
        %480 = vmatpush1.msra.mxu0 0.0
        %481 = vmatprep.subr.mxu0 0.0
        %482 = vmatpush1.msra.mxu0 0.0
        %483 = vmatprep.subr.mxu0 0.0
        %484 = vmatpush1.msra.mxu0 0.0
        %485 = vmatprep.subr.mxu0 0.0
        %486 = vmatpush1.msra.mxu0 0.0
        %487 = vmatprep.subr.mxu0 0.0
        %488 = vmatpush1.msra.mxu0 0.0
        %489 = vmatprep.subr.mxu0 0.0
        %490 = vmatpush1.msra.mxu0 0.0
        %491 = vmatprep.subr.mxu0 0.0
        %492 = vmatpush1.msra.mxu0 0.0
        %493 = vmatprep.subr.mxu0 0.0
        %494 = vmatpush1.msra.mxu0 0.0
        %495 = vmatprep.subr.mxu0 0.0
        %496 = vmatpush1.msra.mxu0 0.0
        %497 = vmatprep.mubr.f32.mxu0 0.0
        %498 = vmatmul.mubr.f32.gmra.mrb[0].mxu0 %v416
        %v499 = vpop.f32.mrb[0].mxu0
        %v500 = vadd.f32 0.0, %v499
        %v501 = vpop.f32.mrb[0].mxu0
        %502 = vdwg.mxu0
        %v503 = vadd.f32 %v414, %v500
        %v504 = vld [vmem:[#allocation2 + $0x2] sm:$0xff]
        %s505 = scalar_lea.vmem [#allocation7], 128
        %v506 = vld [vmem:[%s505] sm:$0xff]
        %v507 = vld [vmem:[%s505 + $0x8] sm:$0xff]
        %v508 = vld [vmem:[%s505 + $0x10] sm:$0xff]
        %v509 = vld [vmem:[%s505 + $0x18] sm:$0xff]
        %v510 = vld [vmem:[%s505 + $0x20] sm:$0xff]
        %v511 = vld [vmem:[%s505 + $0x28] sm:$0xff]
        %v512 = vld [vmem:[%s505 + $0x30] sm:$0xff]
        %v513 = vld [vmem:[%s505 + $0x38] sm:$0xff]
        %v514 = vld [vmem:[%s505 + $0x40] sm:$0xff]
        %v515 = vld [vmem:[%s505 + $0x48] sm:$0xff]
        %v516 = vld [vmem:[%s505 + $0x50] sm:$0xff]
        %v517 = vld [vmem:[%s505 + $0x58] sm:$0xff]
        %v518 = vld [vmem:[%s505 + $0x60] sm:$0xff]
        %v519 = vld [vmem:[%s505 + $0x68] sm:$0xff]
        %v520 = vld [vmem:[%s505 + $0x70] sm:$0xff]
        %v521 = vld [vmem:[%s505 + $0x78] sm:$0xff]
        %522 = vmatprep.subr.mxu0 0.0
        %523 = vmatpush1.msra.mxu0 %v506
        %524 = vmatprep.subr.mxu0 0.0
        %525 = vmatpush1.msra.mxu0 %v507
        %526 = vmatprep.subr.mxu0 0.0
        %527 = vmatpush1.msra.mxu0 %v508
        %528 = vmatprep.subr.mxu0 0.0
        %529 = vmatpush1.msra.mxu0 %v509
        %530 = vmatprep.subr.mxu0 0.0
        %531 = vmatpush1.msra.mxu0 %v510
        %532 = vmatprep.subr.mxu0 0.0
        %533 = vmatpush1.msra.mxu0 %v511
        %534 = vmatprep.subr.mxu0 0.0
        %535 = vmatpush1.msra.mxu0 %v512
        %536 = vmatprep.subr.mxu0 0.0
        %537 = vmatpush1.msra.mxu0 %v513
        %538 = vmatprep.subr.mxu0 0.0
        %539 = vmatpush1.msra.mxu0 %v514
        %540 = vmatprep.subr.mxu0 0.0
        %541 = vmatpush1.msra.mxu0 %v515
        %542 = vmatprep.subr.mxu0 0.0
        %543 = vmatpush1.msra.mxu0 %v516
        %544 = vmatprep.subr.mxu0 0.0
        %545 = vmatpush1.msra.mxu0 %v517
        %546 = vmatprep.subr.mxu0 0.0
        %547 = vmatpush1.msra.mxu0 %v518
        %548 = vmatprep.subr.mxu0 0.0
        %549 = vmatpush1.msra.mxu0 %v519
        %550 = vmatprep.subr.mxu0 0.0
        %551 = vmatpush1.msra.mxu0 %v520
        %552 = vmatprep.subr.mxu0 0.0
        %553 = vmatpush1.msra.mxu0 %v521
        %554 = vmatprep.subr.mxu0 0.0
        %555 = vmatpush1.msra.mxu0 0.0
        %556 = vmatprep.subr.mxu0 0.0
        %557 = vmatpush1.msra.mxu0 0.0
        %558 = vmatprep.subr.mxu0 0.0
        %559 = vmatpush1.msra.mxu0 0.0
        %560 = vmatprep.subr.mxu0 0.0
        %561 = vmatpush1.msra.mxu0 0.0
        %562 = vmatprep.subr.mxu0 0.0
        %563 = vmatpush1.msra.mxu0 0.0
        %564 = vmatprep.subr.mxu0 0.0
        %565 = vmatpush1.msra.mxu0 0.0
        %566 = vmatprep.subr.mxu0 0.0
        %567 = vmatpush1.msra.mxu0 0.0
        %568 = vmatprep.subr.mxu0 0.0
        %569 = vmatpush1.msra.mxu0 0.0
        %570 = vmatprep.subr.mxu0 0.0
        %571 = vmatpush1.msra.mxu0 0.0
        %572 = vmatprep.subr.mxu0 0.0
        %573 = vmatpush1.msra.mxu0 0.0
        %574 = vmatprep.subr.mxu0 0.0
        %575 = vmatpush1.msra.mxu0 0.0
        %576 = vmatprep.subr.mxu0 0.0
        %577 = vmatpush1.msra.mxu0 0.0
        %578 = vmatprep.subr.mxu0 0.0
        %579 = vmatpush1.msra.mxu0 0.0
        %580 = vmatprep.subr.mxu0 0.0
        %581 = vmatpush1.msra.mxu0 0.0
        %582 = vmatprep.subr.mxu0 0.0
        %583 = vmatpush1.msra.mxu0 0.0
        %584 = vmatprep.subr.mxu0 0.0
        %585 = vmatpush1.msra.mxu0 0.0
        %586 = vmatprep.mubr.f32.mxu0 0.0
        %587 = vmatmul.mubr.f32.gmra.mrb[0].mxu0 %v504
        %v588 = vpop.f32.mrb[0].mxu0
        %v589 = vadd.f32 0.0, %v588
        %v590 = vpop.f32.mrb[0].mxu0
        %591 = vdwg.mxu0
        %v592 = vadd.f32 %v503, %v589
        %v593 = vld [vmem:[#allocation2 + $0x4] sm:$0xff]
        %s594 = scalar_lea.vmem [#allocation7], 256
        %v595 = vld [vmem:[%s594] sm:$0xff]
        %v596 = vld [vmem:[%s594 + $0x8] sm:$0xff]
        %v597 = vld [vmem:[%s594 + $0x10] sm:$0xff]
        %v598 = vld [vmem:[%s594 + $0x18] sm:$0xff]
        %v599 = vld [vmem:[%s594 + $0x20] sm:$0xff]
        %v600 = vld [vmem:[%s594 + $0x28] sm:$0xff]
        %v601 = vld [vmem:[%s594 + $0x30] sm:$0xff]
        %v602 = vld [vmem:[%s594 + $0x38] sm:$0xff]
        %v603 = vld [vmem:[%s594 + $0x40] sm:$0xff]
        %v604 = vld [vmem:[%s594 + $0x48] sm:$0xff]
        %v605 = vld [vmem:[%s594 + $0x50] sm:$0xff]
        %v606 = vld [vmem:[%s594 + $0x58] sm:$0xff]
        %v607 = vld [vmem:[%s594 + $0x60] sm:$0xff]
        %v608 = vld [vmem:[%s594 + $0x68] sm:$0xff]
        %v609 = vld [vmem:[%s594 + $0x70] sm:$0xff]
        %v610 = vld [vmem:[%s594 + $0x78] sm:$0xff]
        %611 = vmatprep.subr.mxu0 0.0
        %612 = vmatpush1.msra.mxu0 %v595
        %613 = vmatprep.subr.mxu0 0.0
        %614 = vmatpush1.msra.mxu0 %v596
        %615 = vmatprep.subr.mxu0 0.0
        %616 = vmatpush1.msra.mxu0 %v597
        %617 = vmatprep.subr.mxu0 0.0
        %618 = vmatpush1.msra.mxu0 %v598
        %619 = vmatprep.subr.mxu0 0.0
        %620 = vmatpush1.msra.mxu0 %v599
        %621 = vmatprep.subr.mxu0 0.0
        %622 = vmatpush1.msra.mxu0 %v600
        %623 = vmatprep.subr.mxu0 0.0
        %624 = vmatpush1.msra.mxu0 %v601
        %625 = vmatprep.subr.mxu0 0.0
        %626 = vmatpush1.msra.mxu0 %v602
        %627 = vmatprep.subr.mxu0 0.0
        %628 = vmatpush1.msra.mxu0 %v603
        %629 = vmatprep.subr.mxu0 0.0
        %630 = vmatpush1.msra.mxu0 %v604
        %631 = vmatprep.subr.mxu0 0.0
        %632 = vmatpush1.msra.mxu0 %v605
        %633 = vmatprep.subr.mxu0 0.0
        %634 = vmatpush1.msra.mxu0 %v606
        %635 = vmatprep.subr.mxu0 0.0
        %636 = vmatpush1.msra.mxu0 %v607
        %637 = vmatprep.subr.mxu0 0.0
        %638 = vmatpush1.msra.mxu0 %v608
        %639 = vmatprep.subr.mxu0 0.0
        %640 = vmatpush1.msra.mxu0 %v609
        %641 = vmatprep.subr.mxu0 0.0
        %642 = vmatpush1.msra.mxu0 %v610
        %643 = vmatprep.subr.mxu0 0.0
        %644 = vmatpush1.msra.mxu0 0.0
        %645 = vmatprep.subr.mxu0 0.0
        %646 = vmatpush1.msra.mxu0 0.0
        %647 = vmatprep.subr.mxu0 0.0
        %648 = vmatpush1.msra.mxu0 0.0
        %649 = vmatprep.subr.mxu0 0.0
        %650 = vmatpush1.msra.mxu0 0.0
        %651 = vmatprep.subr.mxu0 0.0
        %652 = vmatpush1.msra.mxu0 0.0
        %653 = vmatprep.subr.mxu0 0.0
        %654 = vmatpush1.msra.mxu0 0.0
        %655 = vmatprep.subr.mxu0 0.0
        %656 = vmatpush1.msra.mxu0 0.0
        %657 = vmatprep.subr.mxu0 0.0
        %658 = vmatpush1.msra.mxu0 0.0
        %659 = vmatprep.subr.mxu0 0.0
        %660 = vmatpush1.msra.mxu0 0.0
        %661 = vmatprep.subr.mxu0 0.0
        %662 = vmatpush1.msra.mxu0 0.0
        %663 = vmatprep.subr.mxu0 0.0
        %664 = vmatpush1.msra.mxu0 0.0
        %665 = vmatprep.subr.mxu0 0.0
        %666 = vmatpush1.msra.mxu0 0.0
        %667 = vmatprep.subr.mxu0 0.0
        %668 = vmatpush1.msra.mxu0 0.0
        %669 = vmatprep.subr.mxu0 0.0
        %670 = vmatpush1.msra.mxu0 0.0
        %671 = vmatprep.subr.mxu0 0.0
        %672 = vmatpush1.msra.mxu0 0.0
        %673 = vmatprep.subr.mxu0 0.0
        %674 = vmatpush1.msra.mxu0 0.0
        %675 = vmatprep.mubr.f32.mxu0 0.0
        %676 = vmatmul.mubr.f32.gmra.mrb[0].mxu0 %v593
        %v677 = vpop.f32.mrb[0].mxu0
        %v678 = vadd.f32 0.0, %v677
        %v679 = vpop.f32.mrb[0].mxu0
        %680 = vdwg.mxu0
        %v681 = vadd.f32 %v592, %v678
        %v682 = vmax.f32 %v681, 0.0
        %683 = vst [vmem:[#allocation3 + $0x4] sm:$0xff] %v682
        %v684 = vld [vmem:[#allocation12] sm:$0x1]
        %v686 = vlaneseq
        %v687 = vshrl.u32 %v686, 7
        %v688 = vsub.s32 0, %v687
        %v689 = vrot.slane %v684, %v688
        %v691 = vld [vmem:[#allocation3] sm:$0xff]
        %v692 = vld [vmem:[#allocation10] sm:$0xff]
        %v693 = vld [vmem:[#allocation10 + $0x8] sm:$0xff]
        %v694 = vld [vmem:[#allocation10 + $0x10] sm:$0xff]
        %v695 = vld [vmem:[#allocation10 + $0x18] sm:$0xff]
        %v696 = vld [vmem:[#allocation10 + $0x20] sm:$0xff]
        %v697 = vld [vmem:[#allocation10 + $0x28] sm:$0xff]
        %v698 = vld [vmem:[#allocation10 + $0x30] sm:$0xff]
        %v699 = vld [vmem:[#allocation10 + $0x38] sm:$0xff]
        %v700 = vld [vmem:[#allocation10 + $0x40] sm:$0xff]
        %v701 = vld [vmem:[#allocation10 + $0x48] sm:$0xff]
        %v702 = vld [vmem:[#allocation10 + $0x50] sm:$0xff]
        %v703 = vld [vmem:[#allocation10 + $0x58] sm:$0xff]
        %v704 = vld [vmem:[#allocation10 + $0x60] sm:$0xff]
        %v705 = vld [vmem:[#allocation10 + $0x68] sm:$0xff]
        %v706 = vld [vmem:[#allocation10 + $0x70] sm:$0xff]
        %v707 = vld [vmem:[#allocation10 + $0x78] sm:$0xff]
        %708 = vmatprep.subr.mxu0 0.0
        %709 = vmatpush1.msra.mxu0 %v692
        %710 = vmatprep.subr.mxu0 0.0
        %711 = vmatpush1.msra.mxu0 %v693
        %712 = vmatprep.subr.mxu0 0.0
        %713 = vmatpush1.msra.mxu0 %v694
        %714 = vmatprep.subr.mxu0 0.0
        %715 = vmatpush1.msra.mxu0 %v695
        %716 = vmatprep.subr.mxu0 0.0
        %717 = vmatpush1.msra.mxu0 %v696
        %718 = vmatprep.subr.mxu0 0.0
        %719 = vmatpush1.msra.mxu0 %v697
        %720 = vmatprep.subr.mxu0 0.0
        %721 = vmatpush1.msra.mxu0 %v698
        %722 = vmatprep.subr.mxu0 0.0
        %723 = vmatpush1.msra.mxu0 %v699
        %724 = vmatprep.subr.mxu0 0.0
        %725 = vmatpush1.msra.mxu0 %v700
        %726 = vmatprep.subr.mxu0 0.0
        %727 = vmatpush1.msra.mxu0 %v701
        %728 = vmatprep.subr.mxu0 0.0
        %729 = vmatpush1.msra.mxu0 %v702
        %730 = vmatprep.subr.mxu0 0.0
        %731 = vmatpush1.msra.mxu0 %v703
        %732 = vmatprep.subr.mxu0 0.0
        %733 = vmatpush1.msra.mxu0 %v704
        %734 = vmatprep.subr.mxu0 0.0
        %735 = vmatpush1.msra.mxu0 %v705
        %736 = vmatprep.subr.mxu0 0.0
        %737 = vmatpush1.msra.mxu0 %v706
        %738 = vmatprep.subr.mxu0 0.0
        %739 = vmatpush1.msra.mxu0 %v707
        %740 = vmatprep.subr.mxu0 0.0
        %741 = vmatpush1.msra.mxu0 0.0
        %742 = vmatprep.subr.mxu0 0.0
        %743 = vmatpush1.msra.mxu0 0.0
        %744 = vmatprep.subr.mxu0 0.0
        %745 = vmatpush1.msra.mxu0 0.0
        %746 = vmatprep.subr.mxu0 0.0
        %747 = vmatpush1.msra.mxu0 0.0
        %748 = vmatprep.subr.mxu0 0.0
        %749 = vmatpush1.msra.mxu0 0.0
        %750 = vmatprep.subr.mxu0 0.0
        %751 = vmatpush1.msra.mxu0 0.0
        %752 = vmatprep.subr.mxu0 0.0
        %753 = vmatpush1.msra.mxu0 0.0
        %754 = vmatprep.subr.mxu0 0.0
        %755 = vmatpush1.msra.mxu0 0.0
        %756 = vmatprep.subr.mxu0 0.0
        %757 = vmatpush1.msra.mxu0 0.0
        %758 = vmatprep.subr.mxu0 0.0
        %759 = vmatpush1.msra.mxu0 0.0
        %760 = vmatprep.subr.mxu0 0.0
        %761 = vmatpush1.msra.mxu0 0.0
        %762 = vmatprep.subr.mxu0 0.0
        %763 = vmatpush1.msra.mxu0 0.0
        %764 = vmatprep.subr.mxu0 0.0
        %765 = vmatpush1.msra.mxu0 0.0
        %766 = vmatprep.subr.mxu0 0.0
        %767 = vmatpush1.msra.mxu0 0.0
        %768 = vmatprep.subr.mxu0 0.0
        %769 = vmatpush1.msra.mxu0 0.0
        %770 = vmatprep.subr.mxu0 0.0
        %771 = vmatpush1.msra.mxu0 0.0
        %772 = vmatprep.mubr.f32.mxu0 0.0
        %773 = vmatmul.mubr.f32.gmra.mrb[0].mxu0 %v691
        %v774 = vpop.f32.mrb[0].mxu0
        %v775 = vadd.f32 0.0, %v774
        %v776 = vpop.f32.mrb[0].mxu0
        %777 = vdwg.mxu0
        %v778 = vadd.f32 %v689, %v775
        %v779 = vld [vmem:[#allocation3 + $0x2] sm:$0xff]
        %s780 = scalar_lea.vmem [#allocation10], 128
        %v781 = vld [vmem:[%s780] sm:$0xff]
        %v782 = vld [vmem:[%s780 + $0x8] sm:$0xff]
        %v783 = vld [vmem:[%s780 + $0x10] sm:$0xff]
        %v784 = vld [vmem:[%s780 + $0x18] sm:$0xff]
        %v785 = vld [vmem:[%s780 + $0x20] sm:$0xff]
        %v786 = vld [vmem:[%s780 + $0x28] sm:$0xff]
        %v787 = vld [vmem:[%s780 + $0x30] sm:$0xff]
        %v788 = vld [vmem:[%s780 + $0x38] sm:$0xff]
        %v789 = vld [vmem:[%s780 + $0x40] sm:$0xff]
        %v790 = vld [vmem:[%s780 + $0x48] sm:$0xff]
        %v791 = vld [vmem:[%s780 + $0x50] sm:$0xff]
        %v792 = vld [vmem:[%s780 + $0x58] sm:$0xff]
        %v793 = vld [vmem:[%s780 + $0x60] sm:$0xff]
        %v794 = vld [vmem:[%s780 + $0x68] sm:$0xff]
        %v795 = vld [vmem:[%s780 + $0x70] sm:$0xff]
        %v796 = vld [vmem:[%s780 + $0x78] sm:$0xff]
        %797 = vmatprep.subr.mxu0 0.0
        %798 = vmatpush1.msra.mxu0 %v781
        %799 = vmatprep.subr.mxu0 0.0
        %800 = vmatpush1.msra.mxu0 %v782
        %801 = vmatprep.subr.mxu0 0.0
        %802 = vmatpush1.msra.mxu0 %v783
        %803 = vmatprep.subr.mxu0 0.0
        %804 = vmatpush1.msra.mxu0 %v784
        %805 = vmatprep.subr.mxu0 0.0
        %806 = vmatpush1.msra.mxu0 %v785
        %807 = vmatprep.subr.mxu0 0.0
        %808 = vmatpush1.msra.mxu0 %v786
        %809 = vmatprep.subr.mxu0 0.0
        %810 = vmatpush1.msra.mxu0 %v787
        %811 = vmatprep.subr.mxu0 0.0
        %812 = vmatpush1.msra.mxu0 %v788
        %813 = vmatprep.subr.mxu0 0.0
        %814 = vmatpush1.msra.mxu0 %v789
        %815 = vmatprep.subr.mxu0 0.0
        %816 = vmatpush1.msra.mxu0 %v790
        %817 = vmatprep.subr.mxu0 0.0
        %818 = vmatpush1.msra.mxu0 %v791
        %819 = vmatprep.subr.mxu0 0.0
        %820 = vmatpush1.msra.mxu0 %v792
        %821 = vmatprep.subr.mxu0 0.0
        %822 = vmatpush1.msra.mxu0 %v793
        %823 = vmatprep.subr.mxu0 0.0
        %824 = vmatpush1.msra.mxu0 %v794
        %825 = vmatprep.subr.mxu0 0.0
        %826 = vmatpush1.msra.mxu0 %v795
        %827 = vmatprep.subr.mxu0 0.0
        %828 = vmatpush1.msra.mxu0 %v796
        %829 = vmatprep.subr.mxu0 0.0
        %830 = vmatpush1.msra.mxu0 0.0
        %831 = vmatprep.subr.mxu0 0.0
        %832 = vmatpush1.msra.mxu0 0.0
        %833 = vmatprep.subr.mxu0 0.0
        %834 = vmatpush1.msra.mxu0 0.0
        %835 = vmatprep.subr.mxu0 0.0
        %836 = vmatpush1.msra.mxu0 0.0
        %837 = vmatprep.subr.mxu0 0.0
        %838 = vmatpush1.msra.mxu0 0.0
        %839 = vmatprep.subr.mxu0 0.0
        %840 = vmatpush1.msra.mxu0 0.0
        %841 = vmatprep.subr.mxu0 0.0
        %842 = vmatpush1.msra.mxu0 0.0
        %843 = vmatprep.subr.mxu0 0.0
        %844 = vmatpush1.msra.mxu0 0.0
        %845 = vmatprep.subr.mxu0 0.0
        %846 = vmatpush1.msra.mxu0 0.0
        %847 = vmatprep.subr.mxu0 0.0
        %848 = vmatpush1.msra.mxu0 0.0
        %849 = vmatprep.subr.mxu0 0.0
        %850 = vmatpush1.msra.mxu0 0.0
        %851 = vmatprep.subr.mxu0 0.0
        %852 = vmatpush1.msra.mxu0 0.0
        %853 = vmatprep.subr.mxu0 0.0
        %854 = vmatpush1.msra.mxu0 0.0
        %855 = vmatprep.subr.mxu0 0.0
        %856 = vmatpush1.msra.mxu0 0.0
        %857 = vmatprep.subr.mxu0 0.0
        %858 = vmatpush1.msra.mxu0 0.0
        %859 = vmatprep.subr.mxu0 0.0
        %860 = vmatpush1.msra.mxu0 0.0
        %861 = vmatprep.mubr.f32.mxu0 0.0
        %862 = vmatmul.mubr.f32.gmra.mrb[0].mxu0 %v779
        %v863 = vpop.f32.mrb[0].mxu0
        %v864 = vadd.f32 0.0, %v863
        %v865 = vpop.f32.mrb[0].mxu0
        %866 = vdwg.mxu0
        %v867 = vadd.f32 %v778, %v864
        %v868 = vld [vmem:[#allocation3 + $0x4] sm:$0xff]
        %s869 = scalar_lea.vmem [#allocation10], 256
        %v870 = vld [vmem:[%s869] sm:$0xff]
        %v871 = vld [vmem:[%s869 + $0x8] sm:$0xff]
        %v872 = vld [vmem:[%s869 + $0x10] sm:$0xff]
        %v873 = vld [vmem:[%s869 + $0x18] sm:$0xff]
        %v874 = vld [vmem:[%s869 + $0x20] sm:$0xff]
        %v875 = vld [vmem:[%s869 + $0x28] sm:$0xff]
        %v876 = vld [vmem:[%s869 + $0x30] sm:$0xff]
        %v877 = vld [vmem:[%s869 + $0x38] sm:$0xff]
        %v878 = vld [vmem:[%s869 + $0x40] sm:$0xff]
        %v879 = vld [vmem:[%s869 + $0x48] sm:$0xff]
        %v880 = vld [vmem:[%s869 + $0x50] sm:$0xff]
        %v881 = vld [vmem:[%s869 + $0x58] sm:$0xff]
        %v882 = vld [vmem:[%s869 + $0x60] sm:$0xff]
        %v883 = vld [vmem:[%s869 + $0x68] sm:$0xff]
        %v884 = vld [vmem:[%s869 + $0x70] sm:$0xff]
        %v885 = vld [vmem:[%s869 + $0x78] sm:$0xff]
        %886 = vmatprep.subr.mxu0 0.0
        %887 = vmatpush1.msra.mxu0 %v870
        %888 = vmatprep.subr.mxu0 0.0
        %889 = vmatpush1.msra.mxu0 %v871
        %890 = vmatprep.subr.mxu0 0.0
        %891 = vmatpush1.msra.mxu0 %v872
        %892 = vmatprep.subr.mxu0 0.0
        %893 = vmatpush1.msra.mxu0 %v873
        %894 = vmatprep.subr.mxu0 0.0
        %895 = vmatpush1.msra.mxu0 %v874
        %896 = vmatprep.subr.mxu0 0.0
        %897 = vmatpush1.msra.mxu0 %v875
        %898 = vmatprep.subr.mxu0 0.0
        %899 = vmatpush1.msra.mxu0 %v876
        %900 = vmatprep.subr.mxu0 0.0
        %901 = vmatpush1.msra.mxu0 %v877
        %902 = vmatprep.subr.mxu0 0.0
        %903 = vmatpush1.msra.mxu0 %v878
        %904 = vmatprep.subr.mxu0 0.0
        %905 = vmatpush1.msra.mxu0 %v879
        %906 = vmatprep.subr.mxu0 0.0
        %907 = vmatpush1.msra.mxu0 %v880
        %908 = vmatprep.subr.mxu0 0.0
        %909 = vmatpush1.msra.mxu0 %v881
        %910 = vmatprep.subr.mxu0 0.0
        %911 = vmatpush1.msra.mxu0 %v882
        %912 = vmatprep.subr.mxu0 0.0
        %913 = vmatpush1.msra.mxu0 %v883
        %914 = vmatprep.subr.mxu0 0.0
        %915 = vmatpush1.msra.mxu0 %v884
        %916 = vmatprep.subr.mxu0 0.0
        %917 = vmatpush1.msra.mxu0 %v885
        %918 = vmatprep.subr.mxu0 0.0
        %919 = vmatpush1.msra.mxu0 0.0
        %920 = vmatprep.subr.mxu0 0.0
        %921 = vmatpush1.msra.mxu0 0.0
        %922 = vmatprep.subr.mxu0 0.0
        %923 = vmatpush1.msra.mxu0 0.0
        %924 = vmatprep.subr.mxu0 0.0
        %925 = vmatpush1.msra.mxu0 0.0
        %926 = vmatprep.subr.mxu0 0.0
        %927 = vmatpush1.msra.mxu0 0.0
        %928 = vmatprep.subr.mxu0 0.0
        %929 = vmatpush1.msra.mxu0 0.0
        %930 = vmatprep.subr.mxu0 0.0
        %931 = vmatpush1.msra.mxu0 0.0
        %932 = vmatprep.subr.mxu0 0.0
        %933 = vmatpush1.msra.mxu0 0.0
        %934 = vmatprep.subr.mxu0 0.0
        %935 = vmatpush1.msra.mxu0 0.0
        %936 = vmatprep.subr.mxu0 0.0
        %937 = vmatpush1.msra.mxu0 0.0
        %938 = vmatprep.subr.mxu0 0.0
        %939 = vmatpush1.msra.mxu0 0.0
        %940 = vmatprep.subr.mxu0 0.0
        %941 = vmatpush1.msra.mxu0 0.0
        %942 = vmatprep.subr.mxu0 0.0
        %943 = vmatpush1.msra.mxu0 0.0
        %944 = vmatprep.subr.mxu0 0.0
        %945 = vmatpush1.msra.mxu0 0.0
        %946 = vmatprep.subr.mxu0 0.0
        %947 = vmatpush1.msra.mxu0 0.0
        %948 = vmatprep.subr.mxu0 0.0
        %949 = vmatpush1.msra.mxu0 0.0
        %950 = vmatprep.mubr.f32.mxu0 0.0
        %951 = vmatmul.mubr.f32.gmra.mrb[0].mxu0 %v868
        %v952 = vpop.f32.mrb[0].mxu0
        %v953 = vadd.f32 0.0, %v952
        %v954 = vpop.f32.mrb[0].mxu0
        %955 = vdwg.mxu0
        %v956 = vadd.f32 %v867, %v953
        %v957 = vmax.f32 %v956, 0.0
        %v958 = vld [vmem:[#allocation13] sm:$0xff]
        %v959 = vld [vmem:[#allocation13 + $0x8] sm:$0xff]
        %v960 = vld [vmem:[#allocation13 + $0x10] sm:$0xff]
        %v961 = vld [vmem:[#allocation13 + $0x18] sm:$0xff]
        %v962 = vld [vmem:[#allocation13 + $0x20] sm:$0xff]
        %v963 = vld [vmem:[#allocation13 + $0x28] sm:$0xff]
        %v964 = vld [vmem:[#allocation13 + $0x30] sm:$0xff]
        %v965 = vld [vmem:[#allocation13 + $0x38] sm:$0xff]
        %v966 = vld [vmem:[#allocation13 + $0x40] sm:$0xff]
        %v967 = vld [vmem:[#allocation13 + $0x48] sm:$0xff]
        %v968 = vld [vmem:[#allocation13 + $0x50] sm:$0xff]
        %v969 = vld [vmem:[#allocation13 + $0x58] sm:$0xff]
        %v970 = vld [vmem:[#allocation13 + $0x60] sm:$0xff]
        %v971 = vld [vmem:[#allocation13 + $0x68] sm:$0xff]
        %v972 = vld [vmem:[#allocation13 + $0x70] sm:$0xff]
        %v973 = vld [vmem:[#allocation13 + $0x78] sm:$0xff]
        %v974 = vld [vmem:[#allocation15] sm:$0x1]
        %v976 = vlaneseq
        %v977 = vshrl.u32 %v976, 7
        %v978 = vsub.s32 0, %v977
        %v979 = vrot.slane %v974, %v978
        %981 = vmatprep.subr.mxu0 0.0
        %982 = vmatpush1.msra.mxu0 %v958
        %983 = vmatprep.subr.mxu0 0.0
        %984 = vmatpush1.msra.mxu0 %v959
        %985 = vmatprep.subr.mxu0 0.0
        %986 = vmatpush1.msra.mxu0 %v960
        %987 = vmatprep.subr.mxu0 0.0
        %988 = vmatpush1.msra.mxu0 %v961
        %989 = vmatprep.subr.mxu0 0.0
        %990 = vmatpush1.msra.mxu0 %v962
        %991 = vmatprep.subr.mxu0 0.0
        %992 = vmatpush1.msra.mxu0 %v963
        %993 = vmatprep.subr.mxu0 0.0
        %994 = vmatpush1.msra.mxu0 %v964
        %995 = vmatprep.subr.mxu0 0.0
        %996 = vmatpush1.msra.mxu0 %v965
        %997 = vmatprep.subr.mxu0 0.0
        %998 = vmatpush1.msra.mxu0 %v966
        %999 = vmatprep.subr.mxu0 0.0
        %1000 = vmatpush1.msra.mxu0 %v967
        %1001 = vmatprep.subr.mxu0 0.0
        %1002 = vmatpush1.msra.mxu0 %v968
        %1003 = vmatprep.subr.mxu0 0.0
        %1004 = vmatpush1.msra.mxu0 %v969
        %1005 = vmatprep.subr.mxu0 0.0
        %1006 = vmatpush1.msra.mxu0 %v970
        %1007 = vmatprep.subr.mxu0 0.0
        %1008 = vmatpush1.msra.mxu0 %v971
        %1009 = vmatprep.subr.mxu0 0.0
        %1010 = vmatpush1.msra.mxu0 %v972
        %1011 = vmatprep.subr.mxu0 0.0
        %1012 = vmatpush1.msra.mxu0 %v973
        %1013 = vmatprep.subr.mxu0 0.0
        %1014 = vmatpush1.msra.mxu0 0.0
        %1015 = vmatprep.subr.mxu0 0.0
        %1016 = vmatpush1.msra.mxu0 0.0
        %1017 = vmatprep.subr.mxu0 0.0
        %1018 = vmatpush1.msra.mxu0 0.0
        %1019 = vmatprep.subr.mxu0 0.0
        %1020 = vmatpush1.msra.mxu0 0.0
        %1021 = vmatprep.subr.mxu0 0.0
        %1022 = vmatpush1.msra.mxu0 0.0
        %1023 = vmatprep.subr.mxu0 0.0
        %1024 = vmatpush1.msra.mxu0 0.0
        %1025 = vmatprep.subr.mxu0 0.0
        %1026 = vmatpush1.msra.mxu0 0.0
        %1027 = vmatprep.subr.mxu0 0.0
        %1028 = vmatpush1.msra.mxu0 0.0
        %1029 = vmatprep.subr.mxu0 0.0
        %1030 = vmatpush1.msra.mxu0 0.0
        %1031 = vmatprep.subr.mxu0 0.0
        %1032 = vmatpush1.msra.mxu0 0.0
        %1033 = vmatprep.subr.mxu0 0.0
        %1034 = vmatpush1.msra.mxu0 0.0
        %1035 = vmatprep.subr.mxu0 0.0
        %1036 = vmatpush1.msra.mxu0 0.0
        %1037 = vmatprep.subr.mxu0 0.0
        %1038 = vmatpush1.msra.mxu0 0.0
        %1039 = vmatprep.subr.mxu0 0.0
        %1040 = vmatpush1.msra.mxu0 0.0
        %1041 = vmatprep.subr.mxu0 0.0
        %1042 = vmatpush1.msra.mxu0 0.0
        %1043 = vmatprep.subr.mxu0 0.0
        %1044 = vmatpush1.msra.mxu0 0.0
        %1045 = vmatprep.mubr.f32.mxu0 0.0
        %1046 = vmatmul.mubr.f32.gmra.mrb[0].mxu0 %v407
        %v1047 = vpop.f32.mrb[0].mxu0
        %v1048 = vadd.f32 %v979, %v1047
        %v1049 = vpop.f32.mrb[0].mxu0
        %1050 = vdwg.mxu0
        %v1051 = vadd.f32 %v957, %v1048
        %v1052 = vmax.f32 %v1051, 0.0
        %1053 = vst [vmem:[%s392] sm:$0xff] %v1052
        %s1054 = sand.u32 %s203, 1
        %s1055 = scalar_lea.sflag [#allocation6], %s1054
        %s1056 = sand.u32 %s203, 1
        %s1057 = smul.addr %s1056, 8
        %s1058 = scalar_lea.vmem [#allocation16], %s1057
        // Predicated region
        $region85: #{tpu_custom_call.1} parent=47 // pred_check
          %p1059 = pneg %p213
        $region86: #{tpu_custom_call.1} parent=47 // pred_check_branch
          %1061 = sbr.rel (%p1059) target = $region88
        $region87: #{tpu_custom_call.1} parent=47 // pred_region
          %s1063 = ssub.s32 128, 128
          %1064 = vsyncadd %s1055, %s1063
          %s1065 = smul.addr %s31, 2
          %s1066 = sadd.s32 %s32, %s1065
          %s1067 = smul.addr %s1066, 128
          %s1068 = scalar_lea.hbm %s7, %s1067
          %s1070 = sshll.u32 %s1058, 4
          %s1071 = int_to_ptr.vmem [resolvable:$true] %s1070
          %1073 = dma.vmem_to_hbm [thread:$0]  %s1071, 128, %s1068, %s1055
        $region88: #{tpu_custom_call.1} parent=47 // pred_fallthru
          _
      $region48: #{tpu_custom_call.1} parent=5 // pred_fallthru
        _
      %p1074 = scmp.le.s32.totalorder 2, %s22
      // Predicated region
      $region89: #{tpu_custom_call.1} parent=5 // pred_check
        %p1075 = pneg %p1074
      $region90: #{tpu_custom_call.1} parent=5 // pred_check_branch
        %1077 = sbr.rel (%p1075) target = $region92
      $region91: #{tpu_custom_call.1} parent=5 // pred_region
        %s1078 = ssub.s32 %s22, 2
        // Predicated region
        $region93: #{tpu_custom_call.1} parent=91 // pred_check
          %p1079 = pneg %p219
        $region94: #{tpu_custom_call.1} parent=91 // pred_check_branch
          %1081 = sbr.rel (%p1079) target = $region96
        $region95: #{tpu_custom_call.1} parent=91 // pred_region
          %s1082 = sand.u32 %s204, 1
          %s1083 = scalar_lea.sflag [#allocation6], %s1082
          %s1084 = sand.u32 %s204, 1
          %s1085 = smul.addr %s1084, 8
          %s1086 = scalar_lea.vmem [#allocation16], %s1085
          %1087 = dma.done %s1083, 128
        $region96: #{tpu_custom_call.1} parent=91 // pred_fallthru
          _
      $region92: #{tpu_custom_call.1} parent=5 // pred_fallthru
        _
    $region6: #{tpu_custom_call.1} parent=1 // loop_footer
      %s26 = sadd.s32 1, %s22
    $region7: #{tpu_custom_call.1} parent=1 // loop_footer_branch
      %21 = sbr.rel target = $region3
    $region8: #{tpu_custom_call.1} parent=1 // loop_exit
      _
    %1088 = vsyncpa [#allocation5], 1
    %s1089 = scalar_lea.sflag [#allocation5], 1
    %1090 = vsyncpa %s1089, 1
    %1091 = vsyncpa [#allocation8], 1
    %1092 = vsyncpa [#allocation11], 1
    %1093 = vsyncpa [#allocation14], 1
    %1094 = vsyncpa [#allocation6], 1
    %s1095 = scalar_lea.sflag [#allocation6], 1
    %1096 = vsyncpa %s1095, 1

</llo_original>
